<compile_context>
chip_gen: v7x
topology: tpu7x:2x2x1
jax: 0.10.0
libtpu: 0.0.40
codegen_flags: <defaults>
</compile_context>

<pallas_src>
import functools

import jax
import jax.numpy as jnp
from jax.experimental import pallas as pl
from jax.experimental.pallas import tpu as pltpu

N_NODE_FEATURES = 2
N_EDGE_FEATURES = 2
N_HIDDEN = 5  # n_neurons inside the model's forward


def _softplus(x):
    # numerically stable softplus, elementwise (VPU + EUP)
    return jnp.log1p(jnp.exp(-jnp.abs(x))) + jnp.maximum(x, 0.0)


# --------------------------------------------------------------------------
# Fused Pallas kernel: (CGConv -> l1 -> relu -> pool) x 2 graphs -> l2 -> relu
# --------------------------------------------------------------------------
def fused_forward_kernel(
        xa_ref, ea_ref, srca_ref, dsta_ref, batcha_ref,
        xb_ref, eb_ref, srcb_ref, dstb_ref, batchb_ref,
        wfd_ref, wfs_ref, wfe_ref, bf_ref,
        wsd_ref, wss_ref, wse_ref, bs_ref,
        w1_ref, b1_ref, w2a_ref, w2b_ref, b2_ref,
        out_ref):
    num_graphs = out_ref.shape[0]

    wfd = wfd_ref[...]   # [C, C]  Wf rows for x_dst
    wfs = wfs_ref[...]   # [C, C]  Wf rows for x_src
    wfe = wfe_ref[...]   # [D, C]  Wf rows for edge_attr
    bf = bf_ref[...]     # [1, C]
    wsd = wsd_ref[...]   # [C, C]  Ws rows for x_dst
    wss = wss_ref[...]   # [C, C]
    wse = wse_ref[...]   # [D, C]
    bs = bs_ref[...]     # [1, C]
    w1 = w1_ref[...]     # [C, H]
    b1 = b1_ref[...]     # [1, H]

    # Hoisted iotas: built once per distinct shape, reused across both gather
    # masks and both graphs (JAX does not CSE iota/broadcast_in_dim).
    iota_cache = {}

    def edge_iota(m, n):
        key = ("edge", m, n)
        if key not in iota_cache:
            iota_cache[key] = jax.lax.broadcasted_iota(jnp.int32, (m, n), 1)
        return iota_cache[key]

    def pool_iota(n):
        key = ("pool", n)
        if key not in iota_cache:
            iota_cache[key] = jax.lax.broadcasted_iota(
                jnp.int32, (num_graphs, n), 0)
        return iota_cache[key]

    def encode(x_ref, e_ref, src_col_ref, dst_col_ref, batch_row_ref):
        x = x_ref[...]                                                # [N, C]
        e = e_ref[...]                                                # [E, D]
        n = x.shape[0]
        m = e.shape[0]

        # --- one-hot gather masks; g_dst is reused below for the scatter-add.
        edge_node = edge_iota(m, n)
        g_dst = (edge_node == dst_col_ref[...]).astype(jnp.float32)   # [E, N]
        g_src = (edge_node == src_col_ref[...]).astype(jnp.float32)   # [E, N]

        # --- fold Wf/Ws into the gather: tiny per-node / per-edge projections
        #     first, then the mask matmuls yield gate pre-activations directly
        #     (no [E, 2C+D] concat, no z materialization, no lane slices).
        yf_d = jnp.dot(x, wfd, preferred_element_type=jnp.float32)    # [N, C]
        yf_s = jnp.dot(x, wfs, preferred_element_type=jnp.float32)    # [N, C]
        ys_d = jnp.dot(x, wsd, preferred_element_type=jnp.float32)    # [N, C]
        ys_s = jnp.dot(x, wss, preferred_element_type=jnp.float32)    # [N, C]
        ef = jnp.dot(e, wfe, preferred_element_type=jnp.float32) + bf  # [E, C]
        es = jnp.dot(e, wse, preferred_element_type=jnp.float32) + bs  # [E, C]

        f_pre = (jnp.dot(g_dst, yf_d, preferred_element_type=jnp.float32)
                 + jnp.dot(g_src, yf_s, preferred_element_type=jnp.float32)
                 + ef)                                                # [E, C]
        s_pre = (jnp.dot(g_dst, ys_d, preferred_element_type=jnp.float32)
                 + jnp.dot(g_src, ys_s, preferred_element_type=jnp.float32)
                 + es)                                                # [E, C]
        msg = jax.nn.sigmoid(f_pre) * _softplus(s_pre)                # [E, C]

        # --- scatter-add into destination nodes: reuse g_dst, contract the
        #     edge axis (no second [N, E] mask build) + residual.
        xp = x + jax.lax.dot_general(
            g_dst, msg,
            dimension_numbers=(((0,), (0,)), ((), ())),
            preferred_element_type=jnp.float32)                       # [N, C]

        # --- l1 -> relu -> global_add_pool (pool mask built from cached iota)
        h = jnp.maximum(
            jnp.dot(xp, w1, preferred_element_type=jnp.float32) + b1, 0.0)  # [N, H]
        pool = (pool_iota(n) == batch_row_ref[...]).astype(jnp.float32)     # [G, N]
        return jnp.dot(pool, h, preferred_element_type=jnp.float32)         # [G, H]

    enc1 = encode(xa_ref, ea_ref, srca_ref, dsta_ref, batcha_ref)
    enc2 = encode(xb_ref, eb_ref, srcb_ref, dstb_ref, batchb_ref)

    # head: l2 + relu.  Concat order ("swap") was folded into w2a / w2b rows.
    o = (jnp.dot(enc1, w2a_ref[...], preferred_element_type=jnp.float32)
         + jnp.dot(enc2, w2b_ref[...], preferred_element_type=jnp.float32)
         + b2_ref[...])                                               # [G, 1]
    out_ref[...] = jnp.maximum(o, 0.0)


# --------------------------------------------------------------------------
# Wrapper: one pallas_call for the whole forward; loss in plain JAX
# --------------------------------------------------------------------------
@functools.partial(jax.jit, static_argnames=("num_graphs", "swap"))
def polyhedron_model_forward(params, poly_a, poly_b, targets=None, *,
                             num_graphs, swap=False):
    """Mirrors PolyhedronModel.forward.  `num_graphs` and `swap` are static."""
    xa, srca, dsta, ea, batcha = poly_a
    xb, srcb, dstb, eb, batchb = poly_b

    c = xa.shape[1]
    h = params["w1"].shape[1]

    # Split Wz outside the kernel so there are no in-kernel row/column slices:
    #   columns: [Wf | Ws]; rows: [x_dst | x_src | edge_attr].
    wz, bz = params["w_z"], params["b_z"]
    wf, ws = wz[:, :c], wz[:, c:]
    bf, bs = bz[:, :c], bz[:, c:]
    wf_dst, wf_src, wf_e = wf[:c], wf[c:2 * c], wf[2 * c:]
    ws_dst, ws_src, ws_e = ws[:c], ws[c:2 * c], ws[2 * c:]

    # cat(enc1, enc2) vs cat(enc2, enc1) is equivalent to swapping W2's row blocks.
    w2 = params["w2"]
    w2_top, w2_bot = w2[:h, :], w2[h:, :]
    w2a, w2b = (w2_bot, w2_top) if swap else (w2_top, w2_bot)

    def col(v):
        return v.astype(jnp.int32).reshape(-1, 1)

    def row(v):
        return v.astype(jnp.int32).reshape(1, -1)

    args = (
        xa, ea, col(srca), col(dsta), row(batcha),
        xb, eb, col(srcb), col(dstb), row(batchb),
        wf_dst, wf_src, wf_e, bf,
        ws_dst, ws_src, ws_e, bs,
        params["w1"], params["b1"], w2a, w2b, params["b2"],
    )
    vmem = pl.BlockSpec(memory_space=pltpu.MemorySpace.VMEM)
    out = pl.pallas_call(
        fused_forward_kernel,
        out_shape=jax.ShapeDtypeStruct((num_graphs, 1), jnp.float32),
        in_specs=[vmem] * len(args),
        out_specs=vmem,
    )(*args)

    if targets is None:
        loss = None
    else:
        loss = jnp.mean((jnp.squeeze(out, axis=1) - targets) ** 2)
    return out, loss


# --------------------------------------------------------------------------
# Pure-JAX reference (for correctness check only)
# --------------------------------------------------------------------------
def _reference_forward(params, poly_a, poly_b, num_graphs, swap):
    def enc(graph):
        x, src, dst, e, batch = graph
        c = x.shape[1]
        z = jnp.concatenate([x[dst], x[src], e], axis=1)
        fs = z @ params["w_z"] + params["b_z"]
        msg = jax.nn.sigmoid(fs[:, :c]) * jax.nn.softplus(fs[:, c:])
        xp = x + jax.ops.segment_sum(msg, dst, num_segments=x.shape[0])
        hh = jnp.maximum(xp @ params["w1"] + params["b1"], 0.0)
        return jax.ops.segment_sum(hh, batch, num_segments=num_graphs)

    e1, e2 = enc(poly_a), enc(poly_b)
    cat = jnp.concatenate([e2, e1] if swap else [e1, e2], axis=1)
    return jnp.maximum(cat @ params["w2"] + params["b2"], 0.0)


# --------------------------------------------------------------------------
# Deterministic parameter init (PyTorch nn.Linear default: U(+-1/sqrt(fan_in)))
# --------------------------------------------------------------------------
def init_params(key):
    c, d, h = N_NODE_FEATURES, N_EDGE_FEATURES, N_HIDDEN
    ks = jax.random.split(key, 8)

    def linear(kw, kb, fan_in, fan_out):
        bound = 1.0 / (fan_in ** 0.5)
        w = jax.random.uniform(kw, (fan_in, fan_out), jnp.float32, -bound, bound)
        b = jax.random.uniform(kb, (1, fan_out), jnp.float32, -bound, bound)
        return w, b

    wf, bf = linear(ks[0], ks[1], 2 * c + d, c)   # CGConv lin_f
    ws, bs = linear(ks[2], ks[3], 2 * c + d, c)   # CGConv lin_s
    w1, b1 = linear(ks[4], ks[5], c, h)           # l1
    w2, b2 = linear(ks[6], ks[7], 2 * h, 1)       # l2
    return {
        "w_z": jnp.concatenate([wf, ws], axis=1),   # [2C+D, 2C], cols = [W_f | W_s]
        "b_z": jnp.concatenate([bf, bs], axis=1),   # [1, 2C]
        "w1": w1, "b1": b1,
        "w2": w2, "b2": b2,
    }


def make_graph(key, n_nodes, n_edges, n_graphs):
    k1, k2, k3, k4 = jax.random.split(key, 4)
    x = jax.random.normal(k1, (n_nodes, N_NODE_FEATURES), jnp.float32)
    src = jax.random.randint(k2, (n_edges,), 0, n_nodes, dtype=jnp.int32)
    dst = jax.random.randint(k3, (n_edges,), 0, n_nodes, dtype=jnp.int32)
    edge_attr = jax.random.normal(k4, (n_edges, N_EDGE_FEATURES), jnp.float32)
    batch = jnp.repeat(jnp.arange(n_graphs, dtype=jnp.int32), n_nodes // n_graphs)
    return (x, src, dst, edge_attr, batch)


if __name__ == "__main__":
    key = jax.random.PRNGKey(0)
    k_par, k_a, k_b, k_t, k_coin = jax.random.split(key, 5)

    params = init_params(k_par)

    n_graphs = 2
    poly_a = make_graph(k_a, n_nodes=8, n_edges=16, n_graphs=n_graphs)
    poly_b = make_graph(k_b, n_nodes=8, n_edges=16, n_graphs=n_graphs)
    targets = jax.random.normal(k_t, (n_graphs,), jnp.float32)

    # TODO(synk): the original forward draws the concat order from torch.randint at
    # runtime; here the coin is drawn once from PRNGKey(0) and passed statically.
    swap = bool(jax.random.randint(k_coin, (), 1, 100) <= 50)

    out, loss = polyhedron_model_forward(params, poly_a, poly_b, targets,
                                         num_graphs=n_graphs, swap=swap)
    jax.block_until_ready((out, loss))

    ref = _reference_forward(params, poly_a, poly_b, n_graphs, swap)
    assert out.shape == (n_graphs, 1) and out.dtype == jnp.float32
    assert bool(jnp.allclose(out, ref, rtol=1e-5, atol=1e-5))
    assert loss.shape == () and bool(jnp.isfinite(loss))
    print("KERNEL_OK")
</pallas_src>

<mosaic_0001>
module attributes {stable_mosaic.version = 11 : i64} {
  func.func @fused_forward_kernel(%arg0: memref<8x2xf32, #tpu.memory_space<vmem>>, %arg1: memref<16x2xf32, #tpu.memory_space<vmem>>, %arg2: memref<16x1xi32, #tpu.memory_space<vmem>>, %arg3: memref<16x1xi32, #tpu.memory_space<vmem>>, %arg4: memref<1x8xi32, #tpu.memory_space<vmem>>, %arg5: memref<8x2xf32, #tpu.memory_space<vmem>>, %arg6: memref<16x2xf32, #tpu.memory_space<vmem>>, %arg7: memref<16x1xi32, #tpu.memory_space<vmem>>, %arg8: memref<16x1xi32, #tpu.memory_space<vmem>>, %arg9: memref<1x8xi32, #tpu.memory_space<vmem>>, %arg10: memref<2x2xf32, #tpu.memory_space<vmem>>, %arg11: memref<2x2xf32, #tpu.memory_space<vmem>>, %arg12: memref<2x2xf32, #tpu.memory_space<vmem>>, %arg13: memref<1x2xf32, #tpu.memory_space<vmem>>, %arg14: memref<2x2xf32, #tpu.memory_space<vmem>>, %arg15: memref<2x2xf32, #tpu.memory_space<vmem>>, %arg16: memref<2x2xf32, #tpu.memory_space<vmem>>, %arg17: memref<1x2xf32, #tpu.memory_space<vmem>>, %arg18: memref<2x5xf32, #tpu.memory_space<vmem>>, %arg19: memref<1x5xf32, #tpu.memory_space<vmem>>, %arg20: memref<5x1xf32, #tpu.memory_space<vmem>>, %arg21: memref<5x1xf32, #tpu.memory_space<vmem>>, %arg22: memref<1x1xf32, #tpu.memory_space<vmem>>, %arg23: memref<2x1xf32, #tpu.memory_space<vmem>>) attributes {dimension_semantics = [], scalar_prefetch = 0 : i64, scratch_operands = 0 : i64, tpu.core_type = #tpu.core_type<tc>} {
    %c0 = arith.constant 0 : index
    %c0_0 = arith.constant 0 : index
    %0 = vector.load %arg10[%c0, %c0_0] : memref<2x2xf32, #tpu.memory_space<vmem>>, vector<2x2xf32>
    %c0_1 = arith.constant 0 : index
    %c0_2 = arith.constant 0 : index
    %1 = vector.load %arg11[%c0_1, %c0_2] : memref<2x2xf32, #tpu.memory_space<vmem>>, vector<2x2xf32>
    %c0_3 = arith.constant 0 : index
    %c0_4 = arith.constant 0 : index
    %2 = vector.load %arg12[%c0_3, %c0_4] : memref<2x2xf32, #tpu.memory_space<vmem>>, vector<2x2xf32>
    %c0_5 = arith.constant 0 : index
    %c0_6 = arith.constant 0 : index
    %3 = vector.load %arg13[%c0_5, %c0_6] : memref<1x2xf32, #tpu.memory_space<vmem>>, vector<1x2xf32>
    %c0_7 = arith.constant 0 : index
    %c0_8 = arith.constant 0 : index
    %4 = vector.load %arg14[%c0_7, %c0_8] : memref<2x2xf32, #tpu.memory_space<vmem>>, vector<2x2xf32>
    %c0_9 = arith.constant 0 : index
    %c0_10 = arith.constant 0 : index
    %5 = vector.load %arg15[%c0_9, %c0_10] : memref<2x2xf32, #tpu.memory_space<vmem>>, vector<2x2xf32>
    %c0_11 = arith.constant 0 : index
    %c0_12 = arith.constant 0 : index
    %6 = vector.load %arg16[%c0_11, %c0_12] : memref<2x2xf32, #tpu.memory_space<vmem>>, vector<2x2xf32>
    %c0_13 = arith.constant 0 : index
    %c0_14 = arith.constant 0 : index
    %7 = vector.load %arg17[%c0_13, %c0_14] : memref<1x2xf32, #tpu.memory_space<vmem>>, vector<1x2xf32>
    %c0_15 = arith.constant 0 : index
    %c0_16 = arith.constant 0 : index
    %8 = vector.load %arg18[%c0_15, %c0_16] : memref<2x5xf32, #tpu.memory_space<vmem>>, vector<2x5xf32>
    %c0_17 = arith.constant 0 : index
    %c0_18 = arith.constant 0 : index
    %9 = vector.load %arg19[%c0_17, %c0_18] : memref<1x5xf32, #tpu.memory_space<vmem>>, vector<1x5xf32>
    %c0_19 = arith.constant 0 : index
    %c0_20 = arith.constant 0 : index
    %10 = vector.load %arg0[%c0_19, %c0_20] : memref<8x2xf32, #tpu.memory_space<vmem>>, vector<8x2xf32>
    %c0_21 = arith.constant 0 : index
    %c0_22 = arith.constant 0 : index
    %11 = vector.load %arg1[%c0_21, %c0_22] : memref<16x2xf32, #tpu.memory_space<vmem>>, vector<16x2xf32>
    %12 = tpu.iota {dimensions = array<i32: 1>} : vector<16x8xi32>
    %c0_23 = arith.constant 0 : index
    %c0_24 = arith.constant 0 : index
    %13 = vector.load %arg3[%c0_23, %c0_24] : memref<16x1xi32, #tpu.memory_space<vmem>>, vector<16x1xi32>
    %14 = vector.broadcast %13 : vector<16x1xi32> to vector<16x8xi32>
    %15 = arith.cmpi eq, %12, %14 : vector<16x8xi32>
    %16 = arith.extui %15 : vector<16x8xi1> to vector<16x8xi32>
    %17 = arith.sitofp %16 : vector<16x8xi32> to vector<16x8xf32>
    %c0_25 = arith.constant 0 : index
    %c0_26 = arith.constant 0 : index
    %18 = vector.load %arg2[%c0_25, %c0_26] : memref<16x1xi32, #tpu.memory_space<vmem>>, vector<16x1xi32>
    %19 = vector.broadcast %18 : vector<16x1xi32> to vector<16x8xi32>
    %20 = arith.cmpi eq, %12, %19 : vector<16x8xi32>
    %21 = arith.extui %20 : vector<16x8xi1> to vector<16x8xi32>
    %22 = arith.sitofp %21 : vector<16x8xi32> to vector<16x8xf32>
    %cst = arith.constant dense<0.000000e+00> : vector<8x2xf32>
    %23 = tpu.matmul %10, %0, %cst {dimension_numbers = #tpu.dot_dimension_numbers<[1], [0], [0], [1], [0, 0, 1, 1], [], []>} : vector<8x2xf32>, vector<2x2xf32>, vector<8x2xf32> -> vector<8x2xf32>
    %cst_27 = arith.constant dense<0.000000e+00> : vector<8x2xf32>
    %24 = tpu.matmul %10, %1, %cst_27 {dimension_numbers = #tpu.dot_dimension_numbers<[1], [0], [0], [1], [0, 0, 1, 1], [], []>} : vector<8x2xf32>, vector<2x2xf32>, vector<8x2xf32> -> vector<8x2xf32>
    %cst_28 = arith.constant dense<0.000000e+00> : vector<8x2xf32>
    %25 = tpu.matmul %10, %4, %cst_28 {dimension_numbers = #tpu.dot_dimension_numbers<[1], [0], [0], [1], [0, 0, 1, 1], [], []>} : vector<8x2xf32>, vector<2x2xf32>, vector<8x2xf32> -> vector<8x2xf32>
    %cst_29 = arith.constant dense<0.000000e+00> : vector<8x2xf32>
    %26 = tpu.matmul %10, %5, %cst_29 {dimension_numbers = #tpu.dot_dimension_numbers<[1], [0], [0], [1], [0, 0, 1, 1], [], []>} : vector<8x2xf32>, vector<2x2xf32>, vector<8x2xf32> -> vector<8x2xf32>
    %cst_30 = arith.constant dense<0.000000e+00> : vector<16x2xf32>
    %27 = tpu.matmul %11, %2, %cst_30 {dimension_numbers = #tpu.dot_dimension_numbers<[1], [0], [0], [1], [0, 0, 1, 1], [], []>} : vector<16x2xf32>, vector<2x2xf32>, vector<16x2xf32> -> vector<16x2xf32>
    %28 = vector.broadcast %3 : vector<1x2xf32> to vector<16x2xf32>
    %29 = arith.addf %27, %28 : vector<16x2xf32>
    %cst_31 = arith.constant dense<0.000000e+00> : vector<16x2xf32>
    %30 = tpu.matmul %11, %6, %cst_31 {dimension_numbers = #tpu.dot_dimension_numbers<[1], [0], [0], [1], [0, 0, 1, 1], [], []>} : vector<16x2xf32>, vector<2x2xf32>, vector<16x2xf32> -> vector<16x2xf32>
    %31 = vector.broadcast %7 : vector<1x2xf32> to vector<16x2xf32>
    %32 = arith.addf %30, %31 : vector<16x2xf32>
    %cst_32 = arith.constant dense<0.000000e+00> : vector<16x2xf32>
    %33 = tpu.matmul %17, %23, %cst_32 {dimension_numbers = #tpu.dot_dimension_numbers<[1], [0], [0], [1], [0, 0, 1, 1], [], []>} : vector<16x8xf32>, vector<8x2xf32>, vector<16x2xf32> -> vector<16x2xf32>
    %cst_33 = arith.constant dense<0.000000e+00> : vector<16x2xf32>
    %34 = tpu.matmul %22, %24, %cst_33 {dimension_numbers = #tpu.dot_dimension_numbers<[1], [0], [0], [1], [0, 0, 1, 1], [], []>} : vector<16x8xf32>, vector<8x2xf32>, vector<16x2xf32> -> vector<16x2xf32>
    %35 = arith.addf %33, %34 : vector<16x2xf32>
    %36 = arith.addf %35, %29 : vector<16x2xf32>
    %cst_34 = arith.constant dense<0.000000e+00> : vector<16x2xf32>
    %37 = tpu.matmul %17, %25, %cst_34 {dimension_numbers = #tpu.dot_dimension_numbers<[1], [0], [0], [1], [0, 0, 1, 1], [], []>} : vector<16x8xf32>, vector<8x2xf32>, vector<16x2xf32> -> vector<16x2xf32>
    %cst_35 = arith.constant dense<0.000000e+00> : vector<16x2xf32>
    %38 = tpu.matmul %22, %26, %cst_35 {dimension_numbers = #tpu.dot_dimension_numbers<[1], [0], [0], [1], [0, 0, 1, 1], [], []>} : vector<16x8xf32>, vector<8x2xf32>, vector<16x2xf32> -> vector<16x2xf32>
    %39 = arith.addf %37, %38 : vector<16x2xf32>
    %40 = arith.addf %39, %32 : vector<16x2xf32>
    %41 = arith.negf %36 : vector<16x2xf32>
    %42 = math.exp %41 : vector<16x2xf32>
    %cst_36 = arith.constant 1.000000e+00 : f32
    %43 = vector.broadcast %cst_36 : f32 to vector<16x2xf32>
    %44 = arith.addf %43, %42 : vector<16x2xf32>
    %45 = arith.divf %43, %44 : vector<16x2xf32>
    %46 = math.absf %40 : vector<16x2xf32>
    %cst_37 = arith.constant 0.000000e+00 : f32
    %47 = vector.broadcast %cst_37 : f32 to vector<16x2xf32>
    %48 = arith.subf %47, %46 : vector<16x2xf32>
    %49 = math.exp %48 : vector<16x2xf32>
    %50 = math.log1p %49 : vector<16x2xf32>
    %cst_38 = arith.constant 0.000000e+00 : f32
    %51 = vector.broadcast %cst_38 : f32 to vector<16x2xf32>
    %52 = arith.maximumf %40, %51 : vector<16x2xf32>
    %53 = arith.addf %50, %52 : vector<16x2xf32>
    %54 = arith.mulf %45, %53 : vector<16x2xf32>
    %cst_39 = arith.constant dense<0.000000e+00> : vector<8x2xf32>
    %55 = tpu.matmul %17, %54, %cst_39 {dimension_numbers = #tpu.dot_dimension_numbers<[0], [0], [1], [1], [0, 1, 1, 1], [], []>} : vector<16x8xf32>, vector<16x2xf32>, vector<8x2xf32> -> vector<8x2xf32>
    %56 = arith.addf %10, %55 : vector<8x2xf32>
    %cst_40 = arith.constant dense<0.000000e+00> : vector<8x5xf32>
    %57 = tpu.matmul %56, %8, %cst_40 {dimension_numbers = #tpu.dot_dimension_numbers<[1], [0], [0], [1], [0, 0, 1, 1], [], []>} : vector<8x2xf32>, vector<2x5xf32>, vector<8x5xf32> -> vector<8x5xf32>
    %58 = vector.broadcast %9 : vector<1x5xf32> to vector<8x5xf32>
    %59 = arith.addf %57, %58 : vector<8x5xf32>
    %cst_41 = arith.constant 0.000000e+00 : f32
    %60 = vector.broadcast %cst_41 : f32 to vector<8x5xf32>
    %61 = arith.maximumf %59, %60 : vector<8x5xf32>
    %62 = tpu.iota {dimensions = array<i32: 0>} : vector<2x8xi32>
    %c0_42 = arith.constant 0 : index
    %c0_43 = arith.constant 0 : index
    %63 = vector.load %arg4[%c0_42, %c0_43] : memref<1x8xi32, #tpu.memory_space<vmem>>, vector<1x8xi32>
    %64 = vector.broadcast %63 : vector<1x8xi32> to vector<2x8xi32>
    %65 = arith.cmpi eq, %62, %64 : vector<2x8xi32>
    %66 = arith.extui %65 : vector<2x8xi1> to vector<2x8xi32>
    %67 = arith.sitofp %66 : vector<2x8xi32> to vector<2x8xf32>
    %cst_44 = arith.constant dense<0.000000e+00> : vector<2x5xf32>
    %68 = tpu.matmul %67, %61, %cst_44 {dimension_numbers = #tpu.dot_dimension_numbers<[1], [0], [0], [1], [0, 0, 1, 1], [], []>} : vector<2x8xf32>, vector<8x5xf32>, vector<2x5xf32> -> vector<2x5xf32>
    %c0_45 = arith.constant 0 : index
    %c0_46 = arith.constant 0 : index
    %69 = vector.load %arg5[%c0_45, %c0_46] : memref<8x2xf32, #tpu.memory_space<vmem>>, vector<8x2xf32>
    %c0_47 = arith.constant 0 : index
    %c0_48 = arith.constant 0 : index
    %70 = vector.load %arg6[%c0_47, %c0_48] : memref<16x2xf32, #tpu.memory_space<vmem>>, vector<16x2xf32>
    %c0_49 = arith.constant 0 : index
    %c0_50 = arith.constant 0 : index
    %71 = vector.load %arg8[%c0_49, %c0_50] : memref<16x1xi32, #tpu.memory_space<vmem>>, vector<16x1xi32>
    %72 = vector.broadcast %71 : vector<16x1xi32> to vector<16x8xi32>
    %73 = arith.cmpi eq, %12, %72 : vector<16x8xi32>
    %74 = arith.extui %73 : vector<16x8xi1> to vector<16x8xi32>
    %75 = arith.sitofp %74 : vector<16x8xi32> to vector<16x8xf32>
    %c0_51 = arith.constant 0 : index
    %c0_52 = arith.constant 0 : index
    %76 = vector.load %arg7[%c0_51, %c0_52] : memref<16x1xi32, #tpu.memory_space<vmem>>, vector<16x1xi32>
    %77 = vector.broadcast %76 : vector<16x1xi32> to vector<16x8xi32>
    %78 = arith.cmpi eq, %12, %77 : vector<16x8xi32>
    %79 = arith.extui %78 : vector<16x8xi1> to vector<16x8xi32>
    %80 = arith.sitofp %79 : vector<16x8xi32> to vector<16x8xf32>
    %cst_53 = arith.constant dense<0.000000e+00> : vector<8x2xf32>
    %81 = tpu.matmul %69, %0, %cst_53 {dimension_numbers = #tpu.dot_dimension_numbers<[1], [0], [0], [1], [0, 0, 1, 1], [], []>} : vector<8x2xf32>, vector<2x2xf32>, vector<8x2xf32> -> vector<8x2xf32>
    %cst_54 = arith.constant dense<0.000000e+00> : vector<8x2xf32>
    %82 = tpu.matmul %69, %1, %cst_54 {dimension_numbers = #tpu.dot_dimension_numbers<[1], [0], [0], [1], [0, 0, 1, 1], [], []>} : vector<8x2xf32>, vector<2x2xf32>, vector<8x2xf32> -> vector<8x2xf32>
    %cst_55 = arith.constant dense<0.000000e+00> : vector<8x2xf32>
    %83 = tpu.matmul %69, %4, %cst_55 {dimension_numbers = #tpu.dot_dimension_numbers<[1], [0], [0], [1], [0, 0, 1, 1], [], []>} : vector<8x2xf32>, vector<2x2xf32>, vector<8x2xf32> -> vector<8x2xf32>
    %cst_56 = arith.constant dense<0.000000e+00> : vector<8x2xf32>
    %84 = tpu.matmul %69, %5, %cst_56 {dimension_numbers = #tpu.dot_dimension_numbers<[1], [0], [0], [1], [0, 0, 1, 1], [], []>} : vector<8x2xf32>, vector<2x2xf32>, vector<8x2xf32> -> vector<8x2xf32>
    %cst_57 = arith.constant dense<0.000000e+00> : vector<16x2xf32>
    %85 = tpu.matmul %70, %2, %cst_57 {dimension_numbers = #tpu.dot_dimension_numbers<[1], [0], [0], [1], [0, 0, 1, 1], [], []>} : vector<16x2xf32>, vector<2x2xf32>, vector<16x2xf32> -> vector<16x2xf32>
    %86 = vector.broadcast %3 : vector<1x2xf32> to vector<16x2xf32>
    %87 = arith.addf %85, %86 : vector<16x2xf32>
    %cst_58 = arith.constant dense<0.000000e+00> : vector<16x2xf32>
    %88 = tpu.matmul %70, %6, %cst_58 {dimension_numbers = #tpu.dot_dimension_numbers<[1], [0], [0], [1], [0, 0, 1, 1], [], []>} : vector<16x2xf32>, vector<2x2xf32>, vector<16x2xf32> -> vector<16x2xf32>
    %89 = vector.broadcast %7 : vector<1x2xf32> to vector<16x2xf32>
    %90 = arith.addf %88, %89 : vector<16x2xf32>
    %cst_59 = arith.constant dense<0.000000e+00> : vector<16x2xf32>
    %91 = tpu.matmul %75, %81, %cst_59 {dimension_numbers = #tpu.dot_dimension_numbers<[1], [0], [0], [1], [0, 0, 1, 1], [], []>} : vector<16x8xf32>, vector<8x2xf32>, vector<16x2xf32> -> vector<16x2xf32>
    %cst_60 = arith.constant dense<0.000000e+00> : vector<16x2xf32>
    %92 = tpu.matmul %80, %82, %cst_60 {dimension_numbers = #tpu.dot_dimension_numbers<[1], [0], [0], [1], [0, 0, 1, 1], [], []>} : vector<16x8xf32>, vector<8x2xf32>, vector<16x2xf32> -> vector<16x2xf32>
    %93 = arith.addf %91, %92 : vector<16x2xf32>
    %94 = arith.addf %93, %87 : vector<16x2xf32>
    %cst_61 = arith.constant dense<0.000000e+00> : vector<16x2xf32>
    %95 = tpu.matmul %75, %83, %cst_61 {dimension_numbers = #tpu.dot_dimension_numbers<[1], [0], [0], [1], [0, 0, 1, 1], [], []>} : vector<16x8xf32>, vector<8x2xf32>, vector<16x2xf32> -> vector<16x2xf32>
    %cst_62 = arith.constant dense<0.000000e+00> : vector<16x2xf32>
    %96 = tpu.matmul %80, %84, %cst_62 {dimension_numbers = #tpu.dot_dimension_numbers<[1], [0], [0], [1], [0, 0, 1, 1], [], []>} : vector<16x8xf32>, vector<8x2xf32>, vector<16x2xf32> -> vector<16x2xf32>
    %97 = arith.addf %95, %96 : vector<16x2xf32>
    %98 = arith.addf %97, %90 : vector<16x2xf32>
    %99 = arith.negf %94 : vector<16x2xf32>
    %100 = math.exp %99 : vector<16x2xf32>
    %cst_63 = arith.constant 1.000000e+00 : f32
    %101 = vector.broadcast %cst_63 : f32 to vector<16x2xf32>
    %102 = arith.addf %101, %100 : vector<16x2xf32>
    %103 = arith.divf %101, %102 : vector<16x2xf32>
    %104 = math.absf %98 : vector<16x2xf32>
    %cst_64 = arith.constant 0.000000e+00 : f32
    %105 = vector.broadcast %cst_64 : f32 to vector<16x2xf32>
    %106 = arith.subf %105, %104 : vector<16x2xf32>
    %107 = math.exp %106 : vector<16x2xf32>
    %108 = math.log1p %107 : vector<16x2xf32>
    %cst_65 = arith.constant 0.000000e+00 : f32
    %109 = vector.broadcast %cst_65 : f32 to vector<16x2xf32>
    %110 = arith.maximumf %98, %109 : vector<16x2xf32>
    %111 = arith.addf %108, %110 : vector<16x2xf32>
    %112 = arith.mulf %103, %111 : vector<16x2xf32>
    %cst_66 = arith.constant dense<0.000000e+00> : vector<8x2xf32>
    %113 = tpu.matmul %75, %112, %cst_66 {dimension_numbers = #tpu.dot_dimension_numbers<[0], [0], [1], [1], [0, 1, 1, 1], [], []>} : vector<16x8xf32>, vector<16x2xf32>, vector<8x2xf32> -> vector<8x2xf32>
    %114 = arith.addf %69, %113 : vector<8x2xf32>
    %cst_67 = arith.constant dense<0.000000e+00> : vector<8x5xf32>
    %115 = tpu.matmul %114, %8, %cst_67 {dimension_numbers = #tpu.dot_dimension_numbers<[1], [0], [0], [1], [0, 0, 1, 1], [], []>} : vector<8x2xf32>, vector<2x5xf32>, vector<8x5xf32> -> vector<8x5xf32>
    %116 = vector.broadcast %9 : vector<1x5xf32> to vector<8x5xf32>
    %117 = arith.addf %115, %116 : vector<8x5xf32>
    %cst_68 = arith.constant 0.000000e+00 : f32
    %118 = vector.broadcast %cst_68 : f32 to vector<8x5xf32>
    %119 = arith.maximumf %117, %118 : vector<8x5xf32>
    %c0_69 = arith.constant 0 : index
    %c0_70 = arith.constant 0 : index
    %120 = vector.load %arg9[%c0_69, %c0_70] : memref<1x8xi32, #tpu.memory_space<vmem>>, vector<1x8xi32>
    %121 = vector.broadcast %120 : vector<1x8xi32> to vector<2x8xi32>
    %122 = arith.cmpi eq, %62, %121 : vector<2x8xi32>
    %123 = arith.extui %122 : vector<2x8xi1> to vector<2x8xi32>
    %124 = arith.sitofp %123 : vector<2x8xi32> to vector<2x8xf32>
    %cst_71 = arith.constant dense<0.000000e+00> : vector<2x5xf32>
    %125 = tpu.matmul %124, %119, %cst_71 {dimension_numbers = #tpu.dot_dimension_numbers<[1], [0], [0], [1], [0, 0, 1, 1], [], []>} : vector<2x8xf32>, vector<8x5xf32>, vector<2x5xf32> -> vector<2x5xf32>
    %c0_72 = arith.constant 0 : index
    %c0_73 = arith.constant 0 : index
    %126 = vector.load %arg20[%c0_72, %c0_73] : memref<5x1xf32, #tpu.memory_space<vmem>>, vector<5x1xf32>
    %cst_74 = arith.constant dense<0.000000e+00> : vector<2x1xf32>
    %127 = tpu.matmul %68, %126, %cst_74 {dimension_numbers = #tpu.dot_dimension_numbers<[1], [0], [0], [1], [0, 0, 1, 1], [], []>} : vector<2x5xf32>, vector<5x1xf32>, vector<2x1xf32> -> vector<2x1xf32>
    %c0_75 = arith.constant 0 : index
    %c0_76 = arith.constant 0 : index
    %128 = vector.load %arg21[%c0_75, %c0_76] : memref<5x1xf32, #tpu.memory_space<vmem>>, vector<5x1xf32>
    %cst_77 = arith.constant dense<0.000000e+00> : vector<2x1xf32>
    %129 = tpu.matmul %125, %128, %cst_77 {dimension_numbers = #tpu.dot_dimension_numbers<[1], [0], [0], [1], [0, 0, 1, 1], [], []>} : vector<2x5xf32>, vector<5x1xf32>, vector<2x1xf32> -> vector<2x1xf32>
    %130 = arith.addf %127, %129 : vector<2x1xf32>
    %c0_78 = arith.constant 0 : index
    %c0_79 = arith.constant 0 : index
    %131 = vector.load %arg22[%c0_78, %c0_79] : memref<1x1xf32, #tpu.memory_space<vmem>>, vector<1x1xf32>
    %132 = vector.broadcast %131 : vector<1x1xf32> to vector<2x1xf32>
    %133 = arith.addf %130, %132 : vector<2x1xf32>
    %cst_80 = arith.constant 0.000000e+00 : f32
    %134 = vector.broadcast %cst_80 : f32 to vector<2x1xf32>
    %135 = arith.maximumf %133, %134 : vector<2x1xf32>
    %c0_81 = arith.constant 0 : index
    %c0_82 = arith.constant 0 : index
    %136 = vector.load %arg23[%c0_81, %c0_82] : memref<2x1xf32, #tpu.memory_space<vmem>>, vector<2x1xf32>
    tpu.vector_store %arg23[%c0_81, %c0_82], %135 {strides = array<i32>} : memref<2x1xf32, #tpu.memory_space<vmem>>, vector<2x1xf32>,
    return
  }
}

</mosaic_0001>

<llo_original>
// kernel: polyhedron_model_forward.1
$region0: #{polyhedron_model_forward.1}
  #allocation0 [shape = 'u32[]', space=smem, size = 0x4, offset = 0x4, fixed_abs, tag = 'smem constant byte address 0x4 - core index']
  #allocation1 [shape = 'u32[144,128]{1,0:T(1,128)}', space=vmem, size = 0x12000, scoped, tag = 'internal scratch']
  #allocation2 [shape = 'f32[1,1]{1,0:T(1,128)S(1)}', space=vmem, size = 0x200, scoped, tag = 'scoped memory for polyhedron_model_forward.1']
  %s0 = inlined_call_operand.vmem [shape: f32[8,2], index: 0, kind: input, shape index: {}]
  %s1 = inlined_call_operand.vmem [shape: f32[16,2], index: 1, kind: input, shape index: {}]
  %s2 = inlined_call_operand.vmem [shape: s32[16,1], index: 2, kind: input, shape index: {}]
  %s3 = inlined_call_operand.vmem [shape: s32[16,1], index: 3, kind: input, shape index: {}]
  %s4 = inlined_call_operand.vmem [shape: s32[1,8], index: 4, kind: input, shape index: {}]
  %s5 = inlined_call_operand.vmem [shape: f32[8,2], index: 5, kind: input, shape index: {}]
  %s6 = inlined_call_operand.vmem [shape: f32[16,2], index: 6, kind: input, shape index: {}]
  %s7 = inlined_call_operand.vmem [shape: s32[16,1], index: 7, kind: input, shape index: {}]
  %s8 = inlined_call_operand.vmem [shape: s32[16,1], index: 8, kind: input, shape index: {}]
  %s9 = inlined_call_operand.vmem [shape: s32[1,8], index: 9, kind: input, shape index: {}]
  %s10 = inlined_call_operand.vmem [shape: f32[2,2], index: 10, kind: input, shape index: {}]
  %s11 = inlined_call_operand.vmem [shape: f32[2,2], index: 11, kind: input, shape index: {}]
  %s12 = inlined_call_operand.vmem [shape: f32[2,2], index: 12, kind: input, shape index: {}]
  %s13 = inlined_call_operand.vmem [shape: f32[1,2], index: 13, kind: input, shape index: {}]
  %s14 = inlined_call_operand.vmem [shape: f32[2,2], index: 14, kind: input, shape index: {}]
  %s15 = inlined_call_operand.vmem [shape: f32[2,2], index: 15, kind: input, shape index: {}]
  %s16 = inlined_call_operand.vmem [shape: f32[2,2], index: 16, kind: input, shape index: {}]
  %s17 = inlined_call_operand.vmem [shape: f32[1,2], index: 17, kind: input, shape index: {}]
  %s18 = inlined_call_operand.vmem [shape: f32[2,5], index: 18, kind: input, shape index: {}]
  %s19 = inlined_call_operand.vmem [shape: f32[1,5], index: 19, kind: input, shape index: {}]
  %s20 = inlined_call_operand.vmem [shape: f32[5,1], index: 20, kind: input, shape index: {}]
  %s21 = inlined_call_operand.vmem [shape: f32[5,1], index: 21, kind: input, shape index: {}]
  %s22 = inlined_call_operand.<no memory space> [shape: f32[1,1], index: 22, kind: input, shape index: {}]
  %s23 = inlined_call_operand.vmem [shape: f32[2,1], index: 23, kind: output, shape index: {}]
  %s24 = sld [smem:[#allocation0]]
  $region102: #{polyhedron_model_forward.1} parent=0
    _
  %s26 = ssub.s32 1, %s24
  %s27 = scalar_select 0, %s26, %s24
  %v28 = vstv %s22
  %29 = vst [vmem:[#allocation2] sm:$0x1] %v28
  // Predicated region
  $region2: #{polyhedron_model_forward.1} parent=0 // pred_check
    _
  $region3: #{polyhedron_model_forward.1} parent=0 // pred_check_branch
    %31 = sbr.rel (0) target = $region5
  $region4: #{polyhedron_model_forward.1} parent=0 // pred_region
    _
  $region5: #{polyhedron_model_forward.1} parent=0 // pred_fallthru
    _
  // Predicated region
  $region6: #{polyhedron_model_forward.1} parent=0 // pred_check
    _
  $region7: #{polyhedron_model_forward.1} parent=0 // pred_check_branch
    %33 = sbr.rel (0) target = $region9
  $region8: #{polyhedron_model_forward.1} parent=0 // pred_region
    _
  $region9: #{polyhedron_model_forward.1} parent=0 // pred_fallthru
    _
  // Predicated region
  $region10: #{polyhedron_model_forward.1} parent=0 // pred_check
    _
  $region11: #{polyhedron_model_forward.1} parent=0 // pred_check_branch
    %35 = sbr.rel (0) target = $region13
  $region12: #{polyhedron_model_forward.1} parent=0 // pred_region
    _
  $region13: #{polyhedron_model_forward.1} parent=0 // pred_fallthru
    _
  // Predicated region
  $region14: #{polyhedron_model_forward.1} parent=0 // pred_check
    _
  $region15: #{polyhedron_model_forward.1} parent=0 // pred_check_branch
    %37 = sbr.rel (0) target = $region17
  $region16: #{polyhedron_model_forward.1} parent=0 // pred_region
    _
  $region17: #{polyhedron_model_forward.1} parent=0 // pred_fallthru
    _
  // Predicated region
  $region18: #{polyhedron_model_forward.1} parent=0 // pred_check
    _
  $region19: #{polyhedron_model_forward.1} parent=0 // pred_check_branch
    %39 = sbr.rel (0) target = $region21
  $region20: #{polyhedron_model_forward.1} parent=0 // pred_region
    _
  $region21: #{polyhedron_model_forward.1} parent=0 // pred_fallthru
    _
  // Predicated region
  $region22: #{polyhedron_model_forward.1} parent=0 // pred_check
    _
  $region23: #{polyhedron_model_forward.1} parent=0 // pred_check_branch
    %41 = sbr.rel (0) target = $region25
  $region24: #{polyhedron_model_forward.1} parent=0 // pred_region
    _
  $region25: #{polyhedron_model_forward.1} parent=0 // pred_fallthru
    _
  // Predicated region
  $region26: #{polyhedron_model_forward.1} parent=0 // pred_check
    _
  $region27: #{polyhedron_model_forward.1} parent=0 // pred_check_branch
    %43 = sbr.rel (0) target = $region29
  $region28: #{polyhedron_model_forward.1} parent=0 // pred_region
    _
  $region29: #{polyhedron_model_forward.1} parent=0 // pred_fallthru
    _
  // Predicated region
  $region30: #{polyhedron_model_forward.1} parent=0 // pred_check
    _
  $region31: #{polyhedron_model_forward.1} parent=0 // pred_check_branch
    %45 = sbr.rel (0) target = $region33
  $region32: #{polyhedron_model_forward.1} parent=0 // pred_region
    _
  $region33: #{polyhedron_model_forward.1} parent=0 // pred_fallthru
    _
  // Predicated region
  $region34: #{polyhedron_model_forward.1} parent=0 // pred_check
    _
  $region35: #{polyhedron_model_forward.1} parent=0 // pred_check_branch
    %47 = sbr.rel (0) target = $region37
  $region36: #{polyhedron_model_forward.1} parent=0 // pred_region
    _
  $region37: #{polyhedron_model_forward.1} parent=0 // pred_fallthru
    _
  // Predicated region
  $region38: #{polyhedron_model_forward.1} parent=0 // pred_check
    _
  $region39: #{polyhedron_model_forward.1} parent=0 // pred_check_branch
    %49 = sbr.rel (0) target = $region41
  $region40: #{polyhedron_model_forward.1} parent=0 // pred_region
    _
  $region41: #{polyhedron_model_forward.1} parent=0 // pred_fallthru
    _
  // Predicated region
  $region42: #{polyhedron_model_forward.1} parent=0 // pred_check
    _
  $region43: #{polyhedron_model_forward.1} parent=0 // pred_check_branch
    %51 = sbr.rel (0) target = $region45
  $region44: #{polyhedron_model_forward.1} parent=0 // pred_region
    _
  $region45: #{polyhedron_model_forward.1} parent=0 // pred_fallthru
    _
  // Predicated region
  $region46: #{polyhedron_model_forward.1} parent=0 // pred_check
    _
  $region47: #{polyhedron_model_forward.1} parent=0 // pred_check_branch
    %53 = sbr.rel (0) target = $region49
  $region48: #{polyhedron_model_forward.1} parent=0 // pred_region
    _
  $region49: #{polyhedron_model_forward.1} parent=0 // pred_fallthru
    _
  // Predicated region
  $region50: #{polyhedron_model_forward.1} parent=0 // pred_check
    _
  $region51: #{polyhedron_model_forward.1} parent=0 // pred_check_branch
    %55 = sbr.rel (0) target = $region53
  $region52: #{polyhedron_model_forward.1} parent=0 // pred_region
    _
  $region53: #{polyhedron_model_forward.1} parent=0 // pred_fallthru
    _
  // Predicated region
  $region54: #{polyhedron_model_forward.1} parent=0 // pred_check
    _
  $region55: #{polyhedron_model_forward.1} parent=0 // pred_check_branch
    %57 = sbr.rel (0) target = $region57
  $region56: #{polyhedron_model_forward.1} parent=0 // pred_region
    _
  $region57: #{polyhedron_model_forward.1} parent=0 // pred_fallthru
    _
  // Predicated region
  $region58: #{polyhedron_model_forward.1} parent=0 // pred_check
    _
  $region59: #{polyhedron_model_forward.1} parent=0 // pred_check_branch
    %59 = sbr.rel (0) target = $region61
  $region60: #{polyhedron_model_forward.1} parent=0 // pred_region
    _
  $region61: #{polyhedron_model_forward.1} parent=0 // pred_fallthru
    _
  // Predicated region
  $region62: #{polyhedron_model_forward.1} parent=0 // pred_check
    _
  $region63: #{polyhedron_model_forward.1} parent=0 // pred_check_branch
    %61 = sbr.rel (0) target = $region65
  $region64: #{polyhedron_model_forward.1} parent=0 // pred_region
    _
  $region65: #{polyhedron_model_forward.1} parent=0 // pred_fallthru
    _
  // Predicated region
  $region66: #{polyhedron_model_forward.1} parent=0 // pred_check
    _
  $region67: #{polyhedron_model_forward.1} parent=0 // pred_check_branch
    %63 = sbr.rel (0) target = $region69
  $region68: #{polyhedron_model_forward.1} parent=0 // pred_region
    _
  $region69: #{polyhedron_model_forward.1} parent=0 // pred_fallthru
    _
  // Predicated region
  $region70: #{polyhedron_model_forward.1} parent=0 // pred_check
    _
  $region71: #{polyhedron_model_forward.1} parent=0 // pred_check_branch
    %65 = sbr.rel (0) target = $region73
  $region72: #{polyhedron_model_forward.1} parent=0 // pred_region
    _
  $region73: #{polyhedron_model_forward.1} parent=0 // pred_fallthru
    _
  // Predicated region
  $region74: #{polyhedron_model_forward.1} parent=0 // pred_check
    _
  $region75: #{polyhedron_model_forward.1} parent=0 // pred_check_branch
    %67 = sbr.rel (0) target = $region77
  $region76: #{polyhedron_model_forward.1} parent=0 // pred_region
    _
  $region77: #{polyhedron_model_forward.1} parent=0 // pred_fallthru
    _
  // Predicated region
  $region78: #{polyhedron_model_forward.1} parent=0 // pred_check
    _
  $region79: #{polyhedron_model_forward.1} parent=0 // pred_check_branch
    %69 = sbr.rel (0) target = $region81
  $region80: #{polyhedron_model_forward.1} parent=0 // pred_region
    _
  $region81: #{polyhedron_model_forward.1} parent=0 // pred_fallthru
    _
  // Predicated region
  $region82: #{polyhedron_model_forward.1} parent=0 // pred_check
    _
  $region83: #{polyhedron_model_forward.1} parent=0 // pred_check_branch
    %71 = sbr.rel (0) target = $region85
  $region84: #{polyhedron_model_forward.1} parent=0 // pred_region
    _
  $region85: #{polyhedron_model_forward.1} parent=0 // pred_fallthru
    _
  // Predicated region
  $region86: #{polyhedron_model_forward.1} parent=0 // pred_check
    _
  $region87: #{polyhedron_model_forward.1} parent=0 // pred_check_branch
    %73 = sbr.rel (0) target = $region89
  $region88: #{polyhedron_model_forward.1} parent=0 // pred_region
    _
  $region89: #{polyhedron_model_forward.1} parent=0 // pred_fallthru
    _
  // Predicated region
  $region90: #{polyhedron_model_forward.1} parent=0 // pred_check
    _
  $region91: #{polyhedron_model_forward.1} parent=0 // pred_check_branch
    %75 = sbr.rel (0) target = $region93
  $region92: #{polyhedron_model_forward.1} parent=0 // pred_region
    _
  $region93: #{polyhedron_model_forward.1} parent=0 // pred_fallthru
    _
  %v76 = vld [vmem:[%s10] sm:$0x3]
  %v77 = vld [vmem:[%s11] sm:$0x3]
  %v78 = vld [vmem:[%s12] sm:$0x3]
  %v79 = vld [vmem:[%s13] sm:$0x1]
  %v80 = vld [vmem:[%s14] sm:$0x3]
  %v81 = vld [vmem:[%s15] sm:$0x3]
  %v82 = vld [vmem:[%s16] sm:$0x3]
  %v83 = vld [vmem:[%s17] sm:$0x1]
  %v84 = vld [vmem:[%s18] sm:$0x3]
  %v85 = vld [vmem:[%s19] sm:$0x1]
  %v86 = vld [vmem:[%s0] sm:$0xff]
  %v87 = vld [vmem:[%s1] sm:$0xff]
  %v88 = vld [vmem:[%s1 + $0x8] sm:$0xff]
  %v89 = vlaneseq
  %v90 = vand.u32 %v89, 127
  %v91 = vld [vmem:[%s3] sm:$0xff]
  %v92 = vld [vmem:[%s3 + $0x8] sm:$0xff]
  %93 = vset.pattern.permute.xlu0 0
  %94 = vperm.xlu0 %93, %v91
  %v95 = vpop.permute.xlu0 %94
  %96 = vset.pattern.permute.xlu0 0
  %97 = vperm.xlu0 %96, %v92
  %v98 = vpop.permute.xlu0 %97
  %vm99 = vcmp.eq.s32.totalorder %v90, %v95
  %vm100 = vcmp.eq.s32.totalorder %v90, %v98
  %v101 = vsel %vm99, 1, 0
  %v102 = vsel %vm100, 1, 0
  %v103 = vcvt.s32.f32 %v101
  %v104 = vcvt.s32.f32 %v102
  %v105 = vld [vmem:[%s2] sm:$0xff]
  %v106 = vld [vmem:[%s2 + $0x8] sm:$0xff]
  %107 = vset.pattern.permute.xlu0 0
  %108 = vperm.xlu0 %107, %v105
  %v109 = vpop.permute.xlu0 %108
  %110 = vset.pattern.permute.xlu0 0
  %111 = vperm.xlu0 %110, %v106
  %v112 = vpop.permute.xlu0 %111
  %vm113 = vcmp.eq.s32.totalorder %v90, %v109
  %vm114 = vcmp.eq.s32.totalorder %v90, %v112
  %v115 = vsel %vm113, 1, 0
  %v116 = vsel %vm114, 1, 0
  %v117 = vcvt.s32.f32 %v115
  %v118 = vcvt.s32.f32 %v116
  %vm119 = vcmask 15360
  %v121 = vsel %vm119, %v86, 0
  %vm123 = vcmask 1041408
  %v125 = vsel %vm123, %v76, 0
  %127 = vmatprep.subr.mxu0 0.0
  %128 = vmatpush1.msra.mxu0 %v125
  %129 = vmatprep.subr.mxu0 0.0
  %130 = vmatpush1.msra.mxu0 0.0
  %131 = vmatprep.subr.mxu0 0.0
  %132 = vmatpush1.msra.mxu0 0.0
  %133 = vmatprep.subr.mxu0 0.0
  %134 = vmatpush1.msra.mxu0 0.0
  %135 = vmatprep.subr.mxu0 0.0
  %136 = vmatpush1.msra.mxu0 0.0
  %137 = vmatprep.subr.mxu0 0.0
  %138 = vmatpush1.msra.mxu0 0.0
  %139 = vmatprep.subr.mxu0 0.0
  %140 = vmatpush1.msra.mxu0 0.0
  %141 = vmatprep.subr.mxu0 0.0
  %142 = vmatpush1.msra.mxu0 0.0
  %143 = vmatprep.subr.mxu0 0.0
  %144 = vmatpush1.msra.mxu0 0.0
  %145 = vmatprep.subr.mxu0 0.0
  %146 = vmatpush1.msra.mxu0 0.0
  %147 = vmatprep.subr.mxu0 0.0
  %148 = vmatpush1.msra.mxu0 0.0
  %149 = vmatprep.subr.mxu0 0.0
  %150 = vmatpush1.msra.mxu0 0.0
  %151 = vmatprep.subr.mxu0 0.0
  %152 = vmatpush1.msra.mxu0 0.0
  %153 = vmatprep.subr.mxu0 0.0
  %154 = vmatpush1.msra.mxu0 0.0
  %155 = vmatprep.subr.mxu0 0.0
  %156 = vmatpush1.msra.mxu0 0.0
  %157 = vmatprep.subr.mxu0 0.0
  %158 = vmatpush1.msra.mxu0 0.0
  %159 = vmatprep.subr.mxu0 0.0
  %160 = vmatpush1.msra.mxu0 0.0
  %161 = vmatprep.subr.mxu0 0.0
  %162 = vmatpush1.msra.mxu0 0.0
  %163 = vmatprep.subr.mxu0 0.0
  %164 = vmatpush1.msra.mxu0 0.0
  %165 = vmatprep.subr.mxu0 0.0
  %166 = vmatpush1.msra.mxu0 0.0
  %167 = vmatprep.subr.mxu0 0.0
  %168 = vmatpush1.msra.mxu0 0.0
  %169 = vmatprep.subr.mxu0 0.0
  %170 = vmatpush1.msra.mxu0 0.0
  %171 = vmatprep.subr.mxu0 0.0
  %172 = vmatpush1.msra.mxu0 0.0
  %173 = vmatprep.subr.mxu0 0.0
  %174 = vmatpush1.msra.mxu0 0.0
  %175 = vmatprep.subr.mxu0 0.0
  %176 = vmatpush1.msra.mxu0 0.0
  %177 = vmatprep.subr.mxu0 0.0
  %178 = vmatpush1.msra.mxu0 0.0
  %179 = vmatprep.subr.mxu0 0.0
  %180 = vmatpush1.msra.mxu0 0.0
  %181 = vmatprep.subr.mxu0 0.0
  %182 = vmatpush1.msra.mxu0 0.0
  %183 = vmatprep.subr.mxu0 0.0
  %184 = vmatpush1.msra.mxu0 0.0
  %185 = vmatprep.subr.mxu0 0.0
  %186 = vmatpush1.msra.mxu0 0.0
  %187 = vmatprep.subr.mxu0 0.0
  %188 = vmatpush1.msra.mxu0 0.0
  %189 = vmatprep.subr.mxu0 0.0
  %190 = vmatpush1.msra.mxu0 0.0
  %191 = vmatprep.mubr.f32.mxu0 0.0
  %192 = vmatmul.mubr.f32.gmra.mrb[0].mxu0 %v121
  %v193 = vpop.f32.mrb[0].mxu0
  %v194 = vadd.f32 0.0, %v193
  %v195 = vpop.f32.mrb[0].mxu0
  %196 = vdwg.mxu0
  %v198 = vsel %vm123, %v77, 0
  %200 = vmatprep.subr.mxu0 0.0
  %201 = vmatpush1.msra.mxu0 %v198
  %202 = vmatprep.subr.mxu0 0.0
  %203 = vmatpush1.msra.mxu0 0.0
  %204 = vmatprep.subr.mxu0 0.0
  %205 = vmatpush1.msra.mxu0 0.0
  %206 = vmatprep.subr.mxu0 0.0
  %207 = vmatpush1.msra.mxu0 0.0
  %208 = vmatprep.subr.mxu0 0.0
  %209 = vmatpush1.msra.mxu0 0.0
  %210 = vmatprep.subr.mxu0 0.0
  %211 = vmatpush1.msra.mxu0 0.0
  %212 = vmatprep.subr.mxu0 0.0
  %213 = vmatpush1.msra.mxu0 0.0
  %214 = vmatprep.subr.mxu0 0.0
  %215 = vmatpush1.msra.mxu0 0.0
  %216 = vmatprep.subr.mxu0 0.0
  %217 = vmatpush1.msra.mxu0 0.0
  %218 = vmatprep.subr.mxu0 0.0
  %219 = vmatpush1.msra.mxu0 0.0
  %220 = vmatprep.subr.mxu0 0.0
  %221 = vmatpush1.msra.mxu0 0.0
  %222 = vmatprep.subr.mxu0 0.0
  %223 = vmatpush1.msra.mxu0 0.0
  %224 = vmatprep.subr.mxu0 0.0
  %225 = vmatpush1.msra.mxu0 0.0
  %226 = vmatprep.subr.mxu0 0.0
  %227 = vmatpush1.msra.mxu0 0.0
  %228 = vmatprep.subr.mxu0 0.0
  %229 = vmatpush1.msra.mxu0 0.0
  %230 = vmatprep.subr.mxu0 0.0
  %231 = vmatpush1.msra.mxu0 0.0
  %232 = vmatprep.subr.mxu0 0.0
  %233 = vmatpush1.msra.mxu0 0.0
  %234 = vmatprep.subr.mxu0 0.0
  %235 = vmatpush1.msra.mxu0 0.0
  %236 = vmatprep.subr.mxu0 0.0
  %237 = vmatpush1.msra.mxu0 0.0
  %238 = vmatprep.subr.mxu0 0.0
  %239 = vmatpush1.msra.mxu0 0.0
  %240 = vmatprep.subr.mxu0 0.0
  %241 = vmatpush1.msra.mxu0 0.0
  %242 = vmatprep.subr.mxu0 0.0
  %243 = vmatpush1.msra.mxu0 0.0
  %244 = vmatprep.subr.mxu0 0.0
  %245 = vmatpush1.msra.mxu0 0.0
  %246 = vmatprep.subr.mxu0 0.0
  %247 = vmatpush1.msra.mxu0 0.0
  %248 = vmatprep.subr.mxu0 0.0
  %249 = vmatpush1.msra.mxu0 0.0
  %250 = vmatprep.subr.mxu0 0.0
  %251 = vmatpush1.msra.mxu0 0.0
  %252 = vmatprep.subr.mxu0 0.0
  %253 = vmatpush1.msra.mxu0 0.0
  %254 = vmatprep.subr.mxu0 0.0
  %255 = vmatpush1.msra.mxu0 0.0
  %256 = vmatprep.subr.mxu0 0.0
  %257 = vmatpush1.msra.mxu0 0.0
  %258 = vmatprep.subr.mxu0 0.0
  %259 = vmatpush1.msra.mxu0 0.0
  %260 = vmatprep.subr.mxu0 0.0
  %261 = vmatpush1.msra.mxu0 0.0
  %262 = vmatprep.subr.mxu0 0.0
  %263 = vmatpush1.msra.mxu0 0.0
  %264 = vmatprep.mubr.f32.mxu0 0.0
  %265 = vmatmul.mubr.f32.gmra.mrb[0].mxu0 %v121
  %v266 = vpop.f32.mrb[0].mxu0
  %v267 = vadd.f32 0.0, %v266
  %v268 = vpop.f32.mrb[0].mxu0
  %269 = vdwg.mxu0
  %v271 = vsel %vm123, %v80, 0
  %273 = vmatprep.subr.mxu0 0.0
  %274 = vmatpush1.msra.mxu0 %v271
  %275 = vmatprep.subr.mxu0 0.0
  %276 = vmatpush1.msra.mxu0 0.0
  %277 = vmatprep.subr.mxu0 0.0
  %278 = vmatpush1.msra.mxu0 0.0
  %279 = vmatprep.subr.mxu0 0.0
  %280 = vmatpush1.msra.mxu0 0.0
  %281 = vmatprep.subr.mxu0 0.0
  %282 = vmatpush1.msra.mxu0 0.0
  %283 = vmatprep.subr.mxu0 0.0
  %284 = vmatpush1.msra.mxu0 0.0
  %285 = vmatprep.subr.mxu0 0.0
  %286 = vmatpush1.msra.mxu0 0.0
  %287 = vmatprep.subr.mxu0 0.0
  %288 = vmatpush1.msra.mxu0 0.0
  %289 = vmatprep.subr.mxu0 0.0
  %290 = vmatpush1.msra.mxu0 0.0
  %291 = vmatprep.subr.mxu0 0.0
  %292 = vmatpush1.msra.mxu0 0.0
  %293 = vmatprep.subr.mxu0 0.0
  %294 = vmatpush1.msra.mxu0 0.0
  %295 = vmatprep.subr.mxu0 0.0
  %296 = vmatpush1.msra.mxu0 0.0
  %297 = vmatprep.subr.mxu0 0.0
  %298 = vmatpush1.msra.mxu0 0.0
  %299 = vmatprep.subr.mxu0 0.0
  %300 = vmatpush1.msra.mxu0 0.0
  %301 = vmatprep.subr.mxu0 0.0
  %302 = vmatpush1.msra.mxu0 0.0
  %303 = vmatprep.subr.mxu0 0.0
  %304 = vmatpush1.msra.mxu0 0.0
  %305 = vmatprep.subr.mxu0 0.0
  %306 = vmatpush1.msra.mxu0 0.0
  %307 = vmatprep.subr.mxu0 0.0
  %308 = vmatpush1.msra.mxu0 0.0
  %309 = vmatprep.subr.mxu0 0.0
  %310 = vmatpush1.msra.mxu0 0.0
  %311 = vmatprep.subr.mxu0 0.0
  %312 = vmatpush1.msra.mxu0 0.0
  %313 = vmatprep.subr.mxu0 0.0
  %314 = vmatpush1.msra.mxu0 0.0
  %315 = vmatprep.subr.mxu0 0.0
  %316 = vmatpush1.msra.mxu0 0.0
  %317 = vmatprep.subr.mxu0 0.0
  %318 = vmatpush1.msra.mxu0 0.0
  %319 = vmatprep.subr.mxu0 0.0
  %320 = vmatpush1.msra.mxu0 0.0
  %321 = vmatprep.subr.mxu0 0.0
  %322 = vmatpush1.msra.mxu0 0.0
  %323 = vmatprep.subr.mxu0 0.0
  %324 = vmatpush1.msra.mxu0 0.0
  %325 = vmatprep.subr.mxu0 0.0
  %326 = vmatpush1.msra.mxu0 0.0
  %327 = vmatprep.subr.mxu0 0.0
  %328 = vmatpush1.msra.mxu0 0.0
  %329 = vmatprep.subr.mxu0 0.0
  %330 = vmatpush1.msra.mxu0 0.0
  %331 = vmatprep.subr.mxu0 0.0
  %332 = vmatpush1.msra.mxu0 0.0
  %333 = vmatprep.subr.mxu0 0.0
  %334 = vmatpush1.msra.mxu0 0.0
  %335 = vmatprep.subr.mxu0 0.0
  %336 = vmatpush1.msra.mxu0 0.0
  %337 = vmatprep.mubr.f32.mxu0 0.0
  %338 = vmatmul.mubr.f32.gmra.mrb[0].mxu0 %v121
  %v339 = vpop.f32.mrb[0].mxu0
  %v340 = vadd.f32 0.0, %v339
  %v341 = vpop.f32.mrb[0].mxu0
  %342 = vdwg.mxu0
  %v344 = vsel %vm123, %v81, 0
  %346 = vmatprep.subr.mxu0 0.0
  %347 = vmatpush1.msra.mxu0 %v344
  %348 = vmatprep.subr.mxu0 0.0
  %349 = vmatpush1.msra.mxu0 0.0
  %350 = vmatprep.subr.mxu0 0.0
  %351 = vmatpush1.msra.mxu0 0.0
  %352 = vmatprep.subr.mxu0 0.0
  %353 = vmatpush1.msra.mxu0 0.0
  %354 = vmatprep.subr.mxu0 0.0
  %355 = vmatpush1.msra.mxu0 0.0
  %356 = vmatprep.subr.mxu0 0.0
  %357 = vmatpush1.msra.mxu0 0.0
  %358 = vmatprep.subr.mxu0 0.0
  %359 = vmatpush1.msra.mxu0 0.0
  %360 = vmatprep.subr.mxu0 0.0
  %361 = vmatpush1.msra.mxu0 0.0
  %362 = vmatprep.subr.mxu0 0.0
  %363 = vmatpush1.msra.mxu0 0.0
  %364 = vmatprep.subr.mxu0 0.0
  %365 = vmatpush1.msra.mxu0 0.0
  %366 = vmatprep.subr.mxu0 0.0
  %367 = vmatpush1.msra.mxu0 0.0
  %368 = vmatprep.subr.mxu0 0.0
  %369 = vmatpush1.msra.mxu0 0.0
  %370 = vmatprep.subr.mxu0 0.0
  %371 = vmatpush1.msra.mxu0 0.0
  %372 = vmatprep.subr.mxu0 0.0
  %373 = vmatpush1.msra.mxu0 0.0
  %374 = vmatprep.subr.mxu0 0.0
  %375 = vmatpush1.msra.mxu0 0.0
  %376 = vmatprep.subr.mxu0 0.0
  %377 = vmatpush1.msra.mxu0 0.0
  %378 = vmatprep.subr.mxu0 0.0
  %379 = vmatpush1.msra.mxu0 0.0
  %380 = vmatprep.subr.mxu0 0.0
  %381 = vmatpush1.msra.mxu0 0.0
  %382 = vmatprep.subr.mxu0 0.0
  %383 = vmatpush1.msra.mxu0 0.0
  %384 = vmatprep.subr.mxu0 0.0
  %385 = vmatpush1.msra.mxu0 0.0
  %386 = vmatprep.subr.mxu0 0.0
  %387 = vmatpush1.msra.mxu0 0.0
  %388 = vmatprep.subr.mxu0 0.0
  %389 = vmatpush1.msra.mxu0 0.0
  %390 = vmatprep.subr.mxu0 0.0
  %391 = vmatpush1.msra.mxu0 0.0
  %392 = vmatprep.subr.mxu0 0.0
  %393 = vmatpush1.msra.mxu0 0.0
  %394 = vmatprep.subr.mxu0 0.0
  %395 = vmatpush1.msra.mxu0 0.0
  %396 = vmatprep.subr.mxu0 0.0
  %397 = vmatpush1.msra.mxu0 0.0
  %398 = vmatprep.subr.mxu0 0.0
  %399 = vmatpush1.msra.mxu0 0.0
  %400 = vmatprep.subr.mxu0 0.0
  %401 = vmatpush1.msra.mxu0 0.0
  %402 = vmatprep.subr.mxu0 0.0
  %403 = vmatpush1.msra.mxu0 0.0
  %404 = vmatprep.subr.mxu0 0.0
  %405 = vmatpush1.msra.mxu0 0.0
  %406 = vmatprep.subr.mxu0 0.0
  %407 = vmatpush1.msra.mxu0 0.0
  %408 = vmatprep.subr.mxu0 0.0
  %409 = vmatpush1.msra.mxu0 0.0
  %410 = vmatprep.mubr.f32.mxu0 0.0
  %411 = vmatmul.mubr.f32.gmra.mrb[0].mxu0 %v121
  %v412 = vpop.f32.mrb[0].mxu0
  %v413 = vadd.f32 0.0, %v412
  %v414 = vpop.f32.mrb[0].mxu0
  %415 = vdwg.mxu0
  %v417 = vlaneseq
  %v418 = vshrl.u32 %v417, 7
  %v419 = vsub.s32 0, %v418
  %v420 = vrot.slane %v79, %v419
  %v423 = vsel %vm119, %v87, 0
  %v426 = vsel %vm119, %v88, 0
  %v429 = vsel %vm123, %v78, 0
  %431 = vmatprep.subr.mxu0 0.0
  %432 = vmatpush1.msra.mxu0 %v429
  %433 = vmatprep.subr.mxu0 0.0
  %434 = vmatpush1.msra.mxu0 0.0
  %435 = vmatprep.subr.mxu0 0.0
  %436 = vmatpush1.msra.mxu0 0.0
  %437 = vmatprep.subr.mxu0 0.0
  %438 = vmatpush1.msra.mxu0 0.0
  %439 = vmatprep.subr.mxu0 0.0
  %440 = vmatpush1.msra.mxu0 0.0
  %441 = vmatprep.subr.mxu0 0.0
  %442 = vmatpush1.msra.mxu0 0.0
  %443 = vmatprep.subr.mxu0 0.0
  %444 = vmatpush1.msra.mxu0 0.0
  %445 = vmatprep.subr.mxu0 0.0
  %446 = vmatpush1.msra.mxu0 0.0
  %447 = vmatprep.subr.mxu0 0.0
  %448 = vmatpush1.msra.mxu0 0.0
  %449 = vmatprep.subr.mxu0 0.0
  %450 = vmatpush1.msra.mxu0 0.0
  %451 = vmatprep.subr.mxu0 0.0
  %452 = vmatpush1.msra.mxu0 0.0
  %453 = vmatprep.subr.mxu0 0.0
  %454 = vmatpush1.msra.mxu0 0.0
  %455 = vmatprep.subr.mxu0 0.0
  %456 = vmatpush1.msra.mxu0 0.0
  %457 = vmatprep.subr.mxu0 0.0
  %458 = vmatpush1.msra.mxu0 0.0
  %459 = vmatprep.subr.mxu0 0.0
  %460 = vmatpush1.msra.mxu0 0.0
  %461 = vmatprep.subr.mxu0 0.0
  %462 = vmatpush1.msra.mxu0 0.0
  %463 = vmatprep.subr.mxu0 0.0
  %464 = vmatpush1.msra.mxu0 0.0
  %465 = vmatprep.subr.mxu0 0.0
  %466 = vmatpush1.msra.mxu0 0.0
  %467 = vmatprep.subr.mxu0 0.0
  %468 = vmatpush1.msra.mxu0 0.0
  %469 = vmatprep.subr.mxu0 0.0
  %470 = vmatpush1.msra.mxu0 0.0
  %471 = vmatprep.subr.mxu0 0.0
  %472 = vmatpush1.msra.mxu0 0.0
  %473 = vmatprep.subr.mxu0 0.0
  %474 = vmatpush1.msra.mxu0 0.0
  %475 = vmatprep.subr.mxu0 0.0
  %476 = vmatpush1.msra.mxu0 0.0
  %477 = vmatprep.subr.mxu0 0.0
  %478 = vmatpush1.msra.mxu0 0.0
  %479 = vmatprep.subr.mxu0 0.0
  %480 = vmatpush1.msra.mxu0 0.0
  %481 = vmatprep.subr.mxu0 0.0
  %482 = vmatpush1.msra.mxu0 0.0
  %483 = vmatprep.subr.mxu0 0.0
  %484 = vmatpush1.msra.mxu0 0.0
  %485 = vmatprep.subr.mxu0 0.0
  %486 = vmatpush1.msra.mxu0 0.0
  %487 = vmatprep.subr.mxu0 0.0
  %488 = vmatpush1.msra.mxu0 0.0
  %489 = vmatprep.subr.mxu0 0.0
  %490 = vmatpush1.msra.mxu0 0.0
  %491 = vmatprep.subr.mxu0 0.0
  %492 = vmatpush1.msra.mxu0 0.0
  %493 = vmatprep.subr.mxu0 0.0
  %494 = vmatpush1.msra.mxu0 0.0
  %495 = vmatprep.mubr.f32.mxu0 0.0
  %496 = vmatmul.mubr.f32.gmra.mrb[0].mxu0 %v423
  %v497 = vpop.f32.mrb[0].mxu0
  %v498 = vadd.f32 %v420, %v497
  %v499 = vpop.f32.mrb[0].mxu0
  %500 = vmatprep.mubr.f32.mxu0 0.0
  %501 = vmatmul.mubr.f32.gmra.mrb[0].mxu0 %v426
  %v502 = vpop.f32.mrb[0].mxu0
  %v503 = vadd.f32 %v420, %v502
  %v504 = vpop.f32.mrb[0].mxu0
  %505 = vdwg.mxu0
  %v507 = vlaneseq
  %v508 = vshrl.u32 %v507, 7
  %v509 = vsub.s32 0, %v508
  %v510 = vrot.slane %v83, %v509
  %v513 = vsel %vm123, %v82, 0
  %515 = vmatprep.subr.mxu0 0.0
  %516 = vmatpush1.msra.mxu0 %v513
  %517 = vmatprep.subr.mxu0 0.0
  %518 = vmatpush1.msra.mxu0 0.0
  %519 = vmatprep.subr.mxu0 0.0
  %520 = vmatpush1.msra.mxu0 0.0
  %521 = vmatprep.subr.mxu0 0.0
  %522 = vmatpush1.msra.mxu0 0.0
  %523 = vmatprep.subr.mxu0 0.0
  %524 = vmatpush1.msra.mxu0 0.0
  %525 = vmatprep.subr.mxu0 0.0
  %526 = vmatpush1.msra.mxu0 0.0
  %527 = vmatprep.subr.mxu0 0.0
  %528 = vmatpush1.msra.mxu0 0.0
  %529 = vmatprep.subr.mxu0 0.0
  %530 = vmatpush1.msra.mxu0 0.0
  %531 = vmatprep.subr.mxu0 0.0
  %532 = vmatpush1.msra.mxu0 0.0
  %533 = vmatprep.subr.mxu0 0.0
  %534 = vmatpush1.msra.mxu0 0.0
  %535 = vmatprep.subr.mxu0 0.0
  %536 = vmatpush1.msra.mxu0 0.0
  %537 = vmatprep.subr.mxu0 0.0
  %538 = vmatpush1.msra.mxu0 0.0
  %539 = vmatprep.subr.mxu0 0.0
  %540 = vmatpush1.msra.mxu0 0.0
  %541 = vmatprep.subr.mxu0 0.0
  %542 = vmatpush1.msra.mxu0 0.0
  %543 = vmatprep.subr.mxu0 0.0
  %544 = vmatpush1.msra.mxu0 0.0
  %545 = vmatprep.subr.mxu0 0.0
  %546 = vmatpush1.msra.mxu0 0.0
  %547 = vmatprep.subr.mxu0 0.0
  %548 = vmatpush1.msra.mxu0 0.0
  %549 = vmatprep.subr.mxu0 0.0
  %550 = vmatpush1.msra.mxu0 0.0
  %551 = vmatprep.subr.mxu0 0.0
  %552 = vmatpush1.msra.mxu0 0.0
  %553 = vmatprep.subr.mxu0 0.0
  %554 = vmatpush1.msra.mxu0 0.0
  %555 = vmatprep.subr.mxu0 0.0
  %556 = vmatpush1.msra.mxu0 0.0
  %557 = vmatprep.subr.mxu0 0.0
  %558 = vmatpush1.msra.mxu0 0.0
  %559 = vmatprep.subr.mxu0 0.0
  %560 = vmatpush1.msra.mxu0 0.0
  %561 = vmatprep.subr.mxu0 0.0
  %562 = vmatpush1.msra.mxu0 0.0
  %563 = vmatprep.subr.mxu0 0.0
  %564 = vmatpush1.msra.mxu0 0.0
  %565 = vmatprep.subr.mxu0 0.0
  %566 = vmatpush1.msra.mxu0 0.0
  %567 = vmatprep.subr.mxu0 0.0
  %568 = vmatpush1.msra.mxu0 0.0
  %569 = vmatprep.subr.mxu0 0.0
  %570 = vmatpush1.msra.mxu0 0.0
  %571 = vmatprep.subr.mxu0 0.0
  %572 = vmatpush1.msra.mxu0 0.0
  %573 = vmatprep.subr.mxu0 0.0
  %574 = vmatpush1.msra.mxu0 0.0
  %575 = vmatprep.subr.mxu0 0.0
  %576 = vmatpush1.msra.mxu0 0.0
  %577 = vmatprep.subr.mxu0 0.0
  %578 = vmatpush1.msra.mxu0 0.0
  %579 = vmatprep.mubr.f32.mxu0 0.0
  %580 = vmatmul.mubr.f32.gmra.mrb[0].mxu0 %v423
  %v581 = vpop.f32.mrb[0].mxu0
  %v582 = vadd.f32 %v510, %v581
  %v583 = vpop.f32.mrb[0].mxu0
  %584 = vmatprep.mubr.f32.mxu0 0.0
  %585 = vmatmul.mubr.f32.gmra.mrb[0].mxu0 %v426
  %v586 = vpop.f32.mrb[0].mxu0
  %v587 = vadd.f32 %v510, %v586
  %v588 = vpop.f32.mrb[0].mxu0
  %589 = vdwg.mxu0
  %vm590 = vcmask 64512
  %v592 = vsel %vm590, %v117, 0
  %v595 = vsel %vm590, %v118, 0
  %597 = vmatprep.subr.mxu0 0.0
  %598 = vmatpush1.msra.mxu0 %v267
  %599 = vmatprep.subr.mxu0 0.0
  %600 = vmatpush1.msra.mxu0 0.0
  %601 = vmatprep.subr.mxu0 0.0
  %602 = vmatpush1.msra.mxu0 0.0
  %603 = vmatprep.subr.mxu0 0.0
  %604 = vmatpush1.msra.mxu0 0.0
  %605 = vmatprep.subr.mxu0 0.0
  %606 = vmatpush1.msra.mxu0 0.0
  %607 = vmatprep.subr.mxu0 0.0
  %608 = vmatpush1.msra.mxu0 0.0
  %609 = vmatprep.subr.mxu0 0.0
  %610 = vmatpush1.msra.mxu0 0.0
  %611 = vmatprep.subr.mxu0 0.0
  %612 = vmatpush1.msra.mxu0 0.0
  %613 = vmatprep.subr.mxu0 0.0
  %614 = vmatpush1.msra.mxu0 0.0
  %615 = vmatprep.subr.mxu0 0.0
  %616 = vmatpush1.msra.mxu0 0.0
  %617 = vmatprep.subr.mxu0 0.0
  %618 = vmatpush1.msra.mxu0 0.0
  %619 = vmatprep.subr.mxu0 0.0
  %620 = vmatpush1.msra.mxu0 0.0
  %621 = vmatprep.subr.mxu0 0.0
  %622 = vmatpush1.msra.mxu0 0.0
  %623 = vmatprep.subr.mxu0 0.0
  %624 = vmatpush1.msra.mxu0 0.0
  %625 = vmatprep.subr.mxu0 0.0
  %626 = vmatpush1.msra.mxu0 0.0
  %627 = vmatprep.subr.mxu0 0.0
  %628 = vmatpush1.msra.mxu0 0.0
  %629 = vmatprep.subr.mxu0 0.0
  %630 = vmatpush1.msra.mxu0 0.0
  %631 = vmatprep.subr.mxu0 0.0
  %632 = vmatpush1.msra.mxu0 0.0
  %633 = vmatprep.subr.mxu0 0.0
  %634 = vmatpush1.msra.mxu0 0.0
  %635 = vmatprep.subr.mxu0 0.0
  %636 = vmatpush1.msra.mxu0 0.0
  %637 = vmatprep.subr.mxu0 0.0
  %638 = vmatpush1.msra.mxu0 0.0
  %639 = vmatprep.subr.mxu0 0.0
  %640 = vmatpush1.msra.mxu0 0.0
  %641 = vmatprep.subr.mxu0 0.0
  %642 = vmatpush1.msra.mxu0 0.0
  %643 = vmatprep.subr.mxu0 0.0
  %644 = vmatpush1.msra.mxu0 0.0
  %645 = vmatprep.subr.mxu0 0.0
  %646 = vmatpush1.msra.mxu0 0.0
  %647 = vmatprep.subr.mxu0 0.0
  %648 = vmatpush1.msra.mxu0 0.0
  %649 = vmatprep.subr.mxu0 0.0
  %650 = vmatpush1.msra.mxu0 0.0
  %651 = vmatprep.subr.mxu0 0.0
  %652 = vmatpush1.msra.mxu0 0.0
  %653 = vmatprep.subr.mxu0 0.0
  %654 = vmatpush1.msra.mxu0 0.0
  %655 = vmatprep.subr.mxu0 0.0
  %656 = vmatpush1.msra.mxu0 0.0
  %657 = vmatprep.subr.mxu0 0.0
  %658 = vmatpush1.msra.mxu0 0.0
  %659 = vmatprep.subr.mxu0 0.0
  %660 = vmatpush1.msra.mxu0 0.0
  %661 = vmatprep.mubr.f32.mxu0 0.0
  %662 = vmatmul.mubr.f32.gmra.mrb[0].mxu0 %v592
  %v663 = vpop.f32.mrb[0].mxu0
  %v664 = vadd.f32 0.0, %v663
  %v665 = vpop.f32.mrb[0].mxu0
  %666 = vmatprep.mubr.f32.mxu0 0.0
  %667 = vmatmul.mubr.f32.gmra.mrb[0].mxu0 %v595
  %v668 = vpop.f32.mrb[0].mxu0
  %v669 = vadd.f32 0.0, %v668
  %v670 = vpop.f32.mrb[0].mxu0
  %671 = vdwg.mxu0
  %v673 = vsel %vm590, %v103, 0
  %v676 = vsel %vm590, %v104, 0
  %678 = vmatprep.subr.mxu0 0.0
  %679 = vmatpush1.msra.mxu0 %v194
  %680 = vmatprep.subr.mxu0 0.0
  %681 = vmatpush1.msra.mxu0 0.0
  %682 = vmatprep.subr.mxu0 0.0
  %683 = vmatpush1.msra.mxu0 0.0
  %684 = vmatprep.subr.mxu0 0.0
  %685 = vmatpush1.msra.mxu0 0.0
  %686 = vmatprep.subr.mxu0 0.0
  %687 = vmatpush1.msra.mxu0 0.0
  %688 = vmatprep.subr.mxu0 0.0
  %689 = vmatpush1.msra.mxu0 0.0
  %690 = vmatprep.subr.mxu0 0.0
  %691 = vmatpush1.msra.mxu0 0.0
  %692 = vmatprep.subr.mxu0 0.0
  %693 = vmatpush1.msra.mxu0 0.0
  %694 = vmatprep.subr.mxu0 0.0
  %695 = vmatpush1.msra.mxu0 0.0
  %696 = vmatprep.subr.mxu0 0.0
  %697 = vmatpush1.msra.mxu0 0.0
  %698 = vmatprep.subr.mxu0 0.0
  %699 = vmatpush1.msra.mxu0 0.0
  %700 = vmatprep.subr.mxu0 0.0
  %701 = vmatpush1.msra.mxu0 0.0
  %702 = vmatprep.subr.mxu0 0.0
  %703 = vmatpush1.msra.mxu0 0.0
  %704 = vmatprep.subr.mxu0 0.0
  %705 = vmatpush1.msra.mxu0 0.0
  %706 = vmatprep.subr.mxu0 0.0
  %707 = vmatpush1.msra.mxu0 0.0
  %708 = vmatprep.subr.mxu0 0.0
  %709 = vmatpush1.msra.mxu0 0.0
  %710 = vmatprep.subr.mxu0 0.0
  %711 = vmatpush1.msra.mxu0 0.0
  %712 = vmatprep.subr.mxu0 0.0
  %713 = vmatpush1.msra.mxu0 0.0
  %714 = vmatprep.subr.mxu0 0.0
  %715 = vmatpush1.msra.mxu0 0.0
  %716 = vmatprep.subr.mxu0 0.0
  %717 = vmatpush1.msra.mxu0 0.0
  %718 = vmatprep.subr.mxu0 0.0
  %719 = vmatpush1.msra.mxu0 0.0
  %720 = vmatprep.subr.mxu0 0.0
  %721 = vmatpush1.msra.mxu0 0.0
  %722 = vmatprep.subr.mxu0 0.0
  %723 = vmatpush1.msra.mxu0 0.0
  %724 = vmatprep.subr.mxu0 0.0
  %725 = vmatpush1.msra.mxu0 0.0
  %726 = vmatprep.subr.mxu0 0.0
  %727 = vmatpush1.msra.mxu0 0.0
  %728 = vmatprep.subr.mxu0 0.0
  %729 = vmatpush1.msra.mxu0 0.0
  %730 = vmatprep.subr.mxu0 0.0
  %731 = vmatpush1.msra.mxu0 0.0
  %732 = vmatprep.subr.mxu0 0.0
  %733 = vmatpush1.msra.mxu0 0.0
  %734 = vmatprep.subr.mxu0 0.0
  %735 = vmatpush1.msra.mxu0 0.0
  %736 = vmatprep.subr.mxu0 0.0
  %737 = vmatpush1.msra.mxu0 0.0
  %738 = vmatprep.subr.mxu0 0.0
  %739 = vmatpush1.msra.mxu0 0.0
  %740 = vmatprep.subr.mxu0 0.0
  %741 = vmatpush1.msra.mxu0 0.0
  %742 = vmatprep.mubr.f32.mxu0 0.0
  %743 = vmatmul.mubr.f32.gmra.mrb[0].mxu0 %v673
  %v744 = vpop.f32.mrb[0].mxu0
  %v745 = vadd.f32 %v664, %v744
  %v746 = vpop.f32.mrb[0].mxu0
  %747 = vmatprep.mubr.f32.mxu0 0.0
  %748 = vmatmul.mubr.f32.gmra.mrb[0].mxu0 %v676
  %v749 = vpop.f32.mrb[0].mxu0
  %v750 = vadd.f32 %v669, %v749
  %v751 = vpop.f32.mrb[0].mxu0
  %752 = vdwg.mxu0
  %v753 = vadd.f32 %v745, %v498
  %v754 = vadd.f32 %v750, %v503
  %755 = vmatprep.subr.mxu0 0.0
  %756 = vmatpush1.msra.mxu0 %v413
  %757 = vmatprep.subr.mxu0 0.0
  %758 = vmatpush1.msra.mxu0 0.0
  %759 = vmatprep.subr.mxu0 0.0
  %760 = vmatpush1.msra.mxu0 0.0
  %761 = vmatprep.subr.mxu0 0.0
  %762 = vmatpush1.msra.mxu0 0.0
  %763 = vmatprep.subr.mxu0 0.0
  %764 = vmatpush1.msra.mxu0 0.0
  %765 = vmatprep.subr.mxu0 0.0
  %766 = vmatpush1.msra.mxu0 0.0
  %767 = vmatprep.subr.mxu0 0.0
  %768 = vmatpush1.msra.mxu0 0.0
  %769 = vmatprep.subr.mxu0 0.0
  %770 = vmatpush1.msra.mxu0 0.0
  %771 = vmatprep.subr.mxu0 0.0
  %772 = vmatpush1.msra.mxu0 0.0
  %773 = vmatprep.subr.mxu0 0.0
  %774 = vmatpush1.msra.mxu0 0.0
  %775 = vmatprep.subr.mxu0 0.0
  %776 = vmatpush1.msra.mxu0 0.0
  %777 = vmatprep.subr.mxu0 0.0
  %778 = vmatpush1.msra.mxu0 0.0
  %779 = vmatprep.subr.mxu0 0.0
  %780 = vmatpush1.msra.mxu0 0.0
  %781 = vmatprep.subr.mxu0 0.0
  %782 = vmatpush1.msra.mxu0 0.0
  %783 = vmatprep.subr.mxu0 0.0
  %784 = vmatpush1.msra.mxu0 0.0
  %785 = vmatprep.subr.mxu0 0.0
  %786 = vmatpush1.msra.mxu0 0.0
  %787 = vmatprep.subr.mxu0 0.0
  %788 = vmatpush1.msra.mxu0 0.0
  %789 = vmatprep.subr.mxu0 0.0
  %790 = vmatpush1.msra.mxu0 0.0
  %791 = vmatprep.subr.mxu0 0.0
  %792 = vmatpush1.msra.mxu0 0.0
  %793 = vmatprep.subr.mxu0 0.0
  %794 = vmatpush1.msra.mxu0 0.0
  %795 = vmatprep.subr.mxu0 0.0
  %796 = vmatpush1.msra.mxu0 0.0
  %797 = vmatprep.subr.mxu0 0.0
  %798 = vmatpush1.msra.mxu0 0.0
  %799 = vmatprep.subr.mxu0 0.0
  %800 = vmatpush1.msra.mxu0 0.0
  %801 = vmatprep.subr.mxu0 0.0
  %802 = vmatpush1.msra.mxu0 0.0
  %803 = vmatprep.subr.mxu0 0.0
  %804 = vmatpush1.msra.mxu0 0.0
  %805 = vmatprep.subr.mxu0 0.0
  %806 = vmatpush1.msra.mxu0 0.0
  %807 = vmatprep.subr.mxu0 0.0
  %808 = vmatpush1.msra.mxu0 0.0
  %809 = vmatprep.subr.mxu0 0.0
  %810 = vmatpush1.msra.mxu0 0.0
  %811 = vmatprep.subr.mxu0 0.0
  %812 = vmatpush1.msra.mxu0 0.0
  %813 = vmatprep.subr.mxu0 0.0
  %814 = vmatpush1.msra.mxu0 0.0
  %815 = vmatprep.subr.mxu0 0.0
  %816 = vmatpush1.msra.mxu0 0.0
  %817 = vmatprep.subr.mxu0 0.0
  %818 = vmatpush1.msra.mxu0 0.0
  %819 = vmatprep.mubr.f32.mxu0 0.0
  %820 = vmatmul.mubr.f32.gmra.mrb[0].mxu0 %v592
  %v821 = vpop.f32.mrb[0].mxu0
  %v822 = vadd.f32 0.0, %v821
  %v823 = vpop.f32.mrb[0].mxu0
  %824 = vmatprep.mubr.f32.mxu0 0.0
  %825 = vmatmul.mubr.f32.gmra.mrb[0].mxu0 %v595
  %v826 = vpop.f32.mrb[0].mxu0
  %v827 = vadd.f32 0.0, %v826
  %v828 = vpop.f32.mrb[0].mxu0
  %829 = vdwg.mxu0
  %830 = vmatprep.subr.mxu0 0.0
  %831 = vmatpush1.msra.mxu0 %v340
  %832 = vmatprep.subr.mxu0 0.0
  %833 = vmatpush1.msra.mxu0 0.0
  %834 = vmatprep.subr.mxu0 0.0
  %835 = vmatpush1.msra.mxu0 0.0
  %836 = vmatprep.subr.mxu0 0.0
  %837 = vmatpush1.msra.mxu0 0.0
  %838 = vmatprep.subr.mxu0 0.0
  %839 = vmatpush1.msra.mxu0 0.0
  %840 = vmatprep.subr.mxu0 0.0
  %841 = vmatpush1.msra.mxu0 0.0
  %842 = vmatprep.subr.mxu0 0.0
  %843 = vmatpush1.msra.mxu0 0.0
  %844 = vmatprep.subr.mxu0 0.0
  %845 = vmatpush1.msra.mxu0 0.0
  %846 = vmatprep.subr.mxu0 0.0
  %847 = vmatpush1.msra.mxu0 0.0
  %848 = vmatprep.subr.mxu0 0.0
  %849 = vmatpush1.msra.mxu0 0.0
  %850 = vmatprep.subr.mxu0 0.0
  %851 = vmatpush1.msra.mxu0 0.0
  %852 = vmatprep.subr.mxu0 0.0
  %853 = vmatpush1.msra.mxu0 0.0
  %854 = vmatprep.subr.mxu0 0.0
  %855 = vmatpush1.msra.mxu0 0.0
  %856 = vmatprep.subr.mxu0 0.0
  %857 = vmatpush1.msra.mxu0 0.0
  %858 = vmatprep.subr.mxu0 0.0
  %859 = vmatpush1.msra.mxu0 0.0
  %860 = vmatprep.subr.mxu0 0.0
  %861 = vmatpush1.msra.mxu0 0.0
  %862 = vmatprep.subr.mxu0 0.0
  %863 = vmatpush1.msra.mxu0 0.0
  %864 = vmatprep.subr.mxu0 0.0
  %865 = vmatpush1.msra.mxu0 0.0
  %866 = vmatprep.subr.mxu0 0.0
  %867 = vmatpush1.msra.mxu0 0.0
  %868 = vmatprep.subr.mxu0 0.0
  %869 = vmatpush1.msra.mxu0 0.0
  %870 = vmatprep.subr.mxu0 0.0
  %871 = vmatpush1.msra.mxu0 0.0
  %872 = vmatprep.subr.mxu0 0.0
  %873 = vmatpush1.msra.mxu0 0.0
  %874 = vmatprep.subr.mxu0 0.0
  %875 = vmatpush1.msra.mxu0 0.0
  %876 = vmatprep.subr.mxu0 0.0
  %877 = vmatpush1.msra.mxu0 0.0
  %878 = vmatprep.subr.mxu0 0.0
  %879 = vmatpush1.msra.mxu0 0.0
  %880 = vmatprep.subr.mxu0 0.0
  %881 = vmatpush1.msra.mxu0 0.0
  %882 = vmatprep.subr.mxu0 0.0
  %883 = vmatpush1.msra.mxu0 0.0
  %884 = vmatprep.subr.mxu0 0.0
  %885 = vmatpush1.msra.mxu0 0.0
  %886 = vmatprep.subr.mxu0 0.0
  %887 = vmatpush1.msra.mxu0 0.0
  %888 = vmatprep.subr.mxu0 0.0
  %889 = vmatpush1.msra.mxu0 0.0
  %890 = vmatprep.subr.mxu0 0.0
  %891 = vmatpush1.msra.mxu0 0.0
  %892 = vmatprep.subr.mxu0 0.0
  %893 = vmatpush1.msra.mxu0 0.0
  %894 = vmatprep.mubr.f32.mxu0 0.0
  %895 = vmatmul.mubr.f32.gmra.mrb[0].mxu0 %v673
  %v896 = vpop.f32.mrb[0].mxu0
  %v897 = vadd.f32 %v822, %v896
  %v898 = vpop.f32.mrb[0].mxu0
  %899 = vmatprep.mubr.f32.mxu0 0.0
  %900 = vmatmul.mubr.f32.gmra.mrb[0].mxu0 %v676
  %v901 = vpop.f32.mrb[0].mxu0
  %v902 = vadd.f32 %v827, %v901
  %v903 = vpop.f32.mrb[0].mxu0
  %904 = vdwg.mxu0
  %v905 = vadd.f32 %v897, %v582
  %v906 = vadd.f32 %v902, %v587
  %v907 = vxor.u32 %v753, 2147483648
  %v908 = vxor.u32 %v754, 2147483648
  %v909 = vmul.f32 %v907, 1.442695
  %v910 = vpow.pop %v909
  %v911 = vmul.f32 %v908, 1.442695
  %v912 = vpow.pop %v911
  %v913 = vadd.f32 %v910, 1.0
  %v914 = vadd.f32 %v912, 1.0
  %v915 = vrcp.pop %v913
  %v916 = vmul.f32 1.0, %v915
  %v917 = vrcp.pop %v914
  %v918 = vmul.f32 1.0, %v917
  %v919 = vand.u32 2147483647, %v905
  %v920 = vand.u32 2147483647, %v906
  %v921 = vsub.f32 0.0, %v919
  %v922 = vsub.f32 0.0, %v920
  %v923 = vmul.f32 %v921, 1.442695
  %v924 = vpow.pop %v923
  %v925 = vmul.f32 %v922, 1.442695
  %v926 = vpow.pop %v925
  %v927 = vadd.f32 %v924, 1.0
  %v928 = vlog2.pop %v927
  %v929 = vmul.f32 %v928, 0.6931472
  %v930 = vmul.f32 -0.5, %v924
  %v931 = vadd.f32 %v930, 1.0
  %v932 = vmul.f32 %v931, %v924
  %v933 = vand.u32 2147483647, %v924
  %vm934 = vcmp.lt.f32.partialorder %v933, 0.0004427343
  %v935 = vsel %vm934, %v932, %v929
  %v936 = vadd.f32 %v926, 1.0
  %v937 = vlog2.pop %v936
  %v938 = vmul.f32 %v937, 0.6931472
  %v939 = vmul.f32 -0.5, %v926
  %v940 = vadd.f32 %v939, 1.0
  %v941 = vmul.f32 %v940, %v926
  %v942 = vand.u32 2147483647, %v926
  %vm943 = vcmp.lt.f32.partialorder %v942, 0.0004427343
  %v944 = vsel %vm943, %v941, %v938
  %v945 = vmax.f32 %v905, 0.0
  %v946 = vmax.f32 %v906, 0.0
  %v947 = vadd.f32 %v935, %v945
  %v948 = vadd.f32 %v944, %v946
  %v949 = vmul.f32 %v916, %v947
  %v950 = vmul.f32 %v918, %v948
  %951 = vxpose.xlu0.b32.start [1/16] %v103, 128
  %952 = vxpose.xlu0.b32.cont [2/16] %v104, 128
  %953 = vxpose.xlu0.b32.cont [3/16] 0.0, 128
  %954 = vxpose.xlu0.b32.cont [4/16] 0.0, 128
  %955 = vxpose.xlu0.b32.cont [5/16] 0.0, 128
  %956 = vxpose.xlu0.b32.cont [6/16] 0.0, 128
  %957 = vxpose.xlu0.b32.cont [7/16] 0.0, 128
  %958 = vxpose.xlu0.b32.cont [8/16] 0.0, 128
  %959 = vxpose.xlu0.b32.cont [9/16] 0.0, 128
  %960 = vxpose.xlu0.b32.cont [10/16] 0.0, 128
  %961 = vxpose.xlu0.b32.cont [11/16] 0.0, 128
  %962 = vxpose.xlu0.b32.cont [12/16] 0.0, 128
  %963 = vxpose.xlu0.b32.cont [13/16] 0.0, 128
  %964 = vxpose.xlu0.b32.cont [14/16] 0.0, 128
  %965 = vxpose.xlu0.b32.cont [15/16] 0.0, 128
  %966 = vxpose.xlu0.b32.end [16/16] 0.0, 128
  %v967 = vpop.trf.xlu0
  %v968 = vpop.trf.xlu0
  %v969 = vpop.trf.xlu0
  %v970 = vpop.trf.xlu0
  %v971 = vpop.trf.xlu0
  %v972 = vpop.trf.xlu0
  %v973 = vpop.trf.xlu0
  %v974 = vpop.trf.xlu0
  %v975 = vpop.trf.xlu0
  %v976 = vpop.trf.xlu0
  %v977 = vpop.trf.xlu0
  %v978 = vpop.trf.xlu0
  %v979 = vpop.trf.xlu0
  %v980 = vpop.trf.xlu0
  %v981 = vpop.trf.xlu0
  %v982 = vpop.trf.xlu0
  %vm983 = vcmask 130048
  %v985 = vsel %vm983, %v967, 0
  %987 = vmatprep.subr.mxu0 0.0
  %988 = vmatpush1.msra.mxu0 %v949
  %989 = vmatprep.subr.mxu0 0.0
  %990 = vmatpush1.msra.mxu0 %v950
  %991 = vmatprep.subr.mxu0 0.0
  %992 = vmatpush1.msra.mxu0 0.0
  %993 = vmatprep.subr.mxu0 0.0
  %994 = vmatpush1.msra.mxu0 0.0
  %995 = vmatprep.subr.mxu0 0.0
  %996 = vmatpush1.msra.mxu0 0.0
  %997 = vmatprep.subr.mxu0 0.0
  %998 = vmatpush1.msra.mxu0 0.0
  %999 = vmatprep.subr.mxu0 0.0
  %1000 = vmatpush1.msra.mxu0 0.0
  %1001 = vmatprep.subr.mxu0 0.0
  %1002 = vmatpush1.msra.mxu0 0.0
  %1003 = vmatprep.subr.mxu0 0.0
  %1004 = vmatpush1.msra.mxu0 0.0
  %1005 = vmatprep.subr.mxu0 0.0
  %1006 = vmatpush1.msra.mxu0 0.0
  %1007 = vmatprep.subr.mxu0 0.0
  %1008 = vmatpush1.msra.mxu0 0.0
  %1009 = vmatprep.subr.mxu0 0.0
  %1010 = vmatpush1.msra.mxu0 0.0
  %1011 = vmatprep.subr.mxu0 0.0
  %1012 = vmatpush1.msra.mxu0 0.0
  %1013 = vmatprep.subr.mxu0 0.0
  %1014 = vmatpush1.msra.mxu0 0.0
  %1015 = vmatprep.subr.mxu0 0.0
  %1016 = vmatpush1.msra.mxu0 0.0
  %1017 = vmatprep.subr.mxu0 0.0
  %1018 = vmatpush1.msra.mxu0 0.0
  %1019 = vmatprep.subr.mxu0 0.0
  %1020 = vmatpush1.msra.mxu0 0.0
  %1021 = vmatprep.subr.mxu0 0.0
  %1022 = vmatpush1.msra.mxu0 0.0
  %1023 = vmatprep.subr.mxu0 0.0
  %1024 = vmatpush1.msra.mxu0 0.0
  %1025 = vmatprep.subr.mxu0 0.0
  %1026 = vmatpush1.msra.mxu0 0.0
  %1027 = vmatprep.subr.mxu0 0.0
  %1028 = vmatpush1.msra.mxu0 0.0
  %1029 = vmatprep.subr.mxu0 0.0
  %1030 = vmatpush1.msra.mxu0 0.0
  %1031 = vmatprep.subr.mxu0 0.0
  %1032 = vmatpush1.msra.mxu0 0.0
  %1033 = vmatprep.subr.mxu0 0.0
  %1034 = vmatpush1.msra.mxu0 0.0
  %1035 = vmatprep.subr.mxu0 0.0
  %1036 = vmatpush1.msra.mxu0 0.0
  %1037 = vmatprep.subr.mxu0 0.0
  %1038 = vmatpush1.msra.mxu0 0.0
  %1039 = vmatprep.subr.mxu0 0.0
  %1040 = vmatpush1.msra.mxu0 0.0
  %1041 = vmatprep.subr.mxu0 0.0
  %1042 = vmatpush1.msra.mxu0 0.0
  %1043 = vmatprep.subr.mxu0 0.0
  %1044 = vmatpush1.msra.mxu0 0.0
  %1045 = vmatprep.subr.mxu0 0.0
  %1046 = vmatpush1.msra.mxu0 0.0
  %1047 = vmatprep.subr.mxu0 0.0
  %1048 = vmatpush1.msra.mxu0 0.0
  %1049 = vmatprep.subr.mxu0 0.0
  %1050 = vmatpush1.msra.mxu0 0.0
  %1051 = vmatprep.mubr.f32.mxu0 0.0
  %1052 = vmatmul.mubr.f32.gmra.mrb[0].mxu0 %v985
  %v1053 = vpop.f32.mrb[0].mxu0
  %v1054 = vadd.f32 0.0, %v1053
  %v1055 = vpop.f32.mrb[0].mxu0
  %1056 = vdwg.mxu0
  %v1057 = vadd.f32 %v86, %v1054
  %v1059 = vlaneseq
  %v1060 = vshrl.u32 %v1059, 7
  %v1061 = vsub.s32 0, %v1060
  %v1062 = vrot.slane %v85, %v1061
  %v1065 = vsel %vm119, %v1057, 0
  %v1068 = vsel %vm123, %v84, 0
  %1070 = vmatprep.subr.mxu0 0.0
  %1071 = vmatpush1.msra.mxu0 %v1068
  %1072 = vmatprep.subr.mxu0 0.0
  %1073 = vmatpush1.msra.mxu0 0.0
  %1074 = vmatprep.subr.mxu0 0.0
  %1075 = vmatpush1.msra.mxu0 0.0
  %1076 = vmatprep.subr.mxu0 0.0
  %1077 = vmatpush1.msra.mxu0 0.0
  %1078 = vmatprep.subr.mxu0 0.0
  %1079 = vmatpush1.msra.mxu0 0.0
  %1080 = vmatprep.subr.mxu0 0.0
  %1081 = vmatpush1.msra.mxu0 0.0
  %1082 = vmatprep.subr.mxu0 0.0
  %1083 = vmatpush1.msra.mxu0 0.0
  %1084 = vmatprep.subr.mxu0 0.0
  %1085 = vmatpush1.msra.mxu0 0.0
  %1086 = vmatprep.subr.mxu0 0.0
  %1087 = vmatpush1.msra.mxu0 0.0
  %1088 = vmatprep.subr.mxu0 0.0
  %1089 = vmatpush1.msra.mxu0 0.0
  %1090 = vmatprep.subr.mxu0 0.0
  %1091 = vmatpush1.msra.mxu0 0.0
  %1092 = vmatprep.subr.mxu0 0.0
  %1093 = vmatpush1.msra.mxu0 0.0
  %1094 = vmatprep.subr.mxu0 0.0
  %1095 = vmatpush1.msra.mxu0 0.0
  %1096 = vmatprep.subr.mxu0 0.0
  %1097 = vmatpush1.msra.mxu0 0.0
  %1098 = vmatprep.subr.mxu0 0.0
  %1099 = vmatpush1.msra.mxu0 0.0
  %1100 = vmatprep.subr.mxu0 0.0
  %1101 = vmatpush1.msra.mxu0 0.0
  %1102 = vmatprep.subr.mxu0 0.0
  %1103 = vmatpush1.msra.mxu0 0.0
  %1104 = vmatprep.subr.mxu0 0.0
  %1105 = vmatpush1.msra.mxu0 0.0
  %1106 = vmatprep.subr.mxu0 0.0
  %1107 = vmatpush1.msra.mxu0 0.0
  %1108 = vmatprep.subr.mxu0 0.0
  %1109 = vmatpush1.msra.mxu0 0.0
  %1110 = vmatprep.subr.mxu0 0.0
  %1111 = vmatpush1.msra.mxu0 0.0
  %1112 = vmatprep.subr.mxu0 0.0
  %1113 = vmatpush1.msra.mxu0 0.0
  %1114 = vmatprep.subr.mxu0 0.0
  %1115 = vmatpush1.msra.mxu0 0.0
  %1116 = vmatprep.subr.mxu0 0.0
  %1117 = vmatpush1.msra.mxu0 0.0
  %1118 = vmatprep.subr.mxu0 0.0
  %1119 = vmatpush1.msra.mxu0 0.0
  %1120 = vmatprep.subr.mxu0 0.0
  %1121 = vmatpush1.msra.mxu0 0.0
  %1122 = vmatprep.subr.mxu0 0.0
  %1123 = vmatpush1.msra.mxu0 0.0
  %1124 = vmatprep.subr.mxu0 0.0
  %1125 = vmatpush1.msra.mxu0 0.0
  %1126 = vmatprep.subr.mxu0 0.0
  %1127 = vmatpush1.msra.mxu0 0.0
  %1128 = vmatprep.subr.mxu0 0.0
  %1129 = vmatpush1.msra.mxu0 0.0
  %1130 = vmatprep.subr.mxu0 0.0
  %1131 = vmatpush1.msra.mxu0 0.0
  %1132 = vmatprep.subr.mxu0 0.0
  %1133 = vmatpush1.msra.mxu0 0.0
  %1134 = vmatprep.mubr.f32.mxu0 0.0
  %1135 = vmatmul.mubr.f32.gmra.mrb[0].mxu0 %v1065
  %v1136 = vpop.f32.mrb[0].mxu0
  %v1137 = vadd.f32 %v1062, %v1136
  %v1138 = vpop.f32.mrb[0].mxu0
  %1139 = vdwg.mxu0
  %v1140 = vmax.f32 %v1137, 0.0
  %v1141 = vlaneseq
  %v1142 = vshrl.u32 %v1141, 7
  %v1143 = vld [vmem:[%s4] sm:$0x1]
  %v1144 = vlaneseq
  %v1145 = vshrl.u32 %v1144, 7
  %v1146 = vsub.s32 0, %v1145
  %v1147 = vrot.slane %v1143, %v1146
  %vm1148 = vcmp.eq.s32.totalorder %v1142, %v1147
  %v1149 = vsel %vm1148, 1, 0
  %v1150 = vcvt.s32.f32 %v1149
  %v1152 = vsel %vm590, %v1150, 0
  %1154 = vmatprep.subr.mxu0 0.0
  %1155 = vmatpush1.msra.mxu0 %v1140
  %1156 = vmatprep.subr.mxu0 0.0
  %1157 = vmatpush1.msra.mxu0 0.0
  %1158 = vmatprep.subr.mxu0 0.0
  %1159 = vmatpush1.msra.mxu0 0.0
  %1160 = vmatprep.subr.mxu0 0.0
  %1161 = vmatpush1.msra.mxu0 0.0
  %1162 = vmatprep.subr.mxu0 0.0
  %1163 = vmatpush1.msra.mxu0 0.0
  %1164 = vmatprep.subr.mxu0 0.0
  %1165 = vmatpush1.msra.mxu0 0.0
  %1166 = vmatprep.subr.mxu0 0.0
  %1167 = vmatpush1.msra.mxu0 0.0
  %1168 = vmatprep.subr.mxu0 0.0
  %1169 = vmatpush1.msra.mxu0 0.0
  %1170 = vmatprep.subr.mxu0 0.0
  %1171 = vmatpush1.msra.mxu0 0.0
  %1172 = vmatprep.subr.mxu0 0.0
  %1173 = vmatpush1.msra.mxu0 0.0
  %1174 = vmatprep.subr.mxu0 0.0
  %1175 = vmatpush1.msra.mxu0 0.0
  %1176 = vmatprep.subr.mxu0 0.0
  %1177 = vmatpush1.msra.mxu0 0.0
  %1178 = vmatprep.subr.mxu0 0.0
  %1179 = vmatpush1.msra.mxu0 0.0
  %1180 = vmatprep.subr.mxu0 0.0
  %1181 = vmatpush1.msra.mxu0 0.0
  %1182 = vmatprep.subr.mxu0 0.0
  %1183 = vmatpush1.msra.mxu0 0.0
  %1184 = vmatprep.subr.mxu0 0.0
  %1185 = vmatpush1.msra.mxu0 0.0
  %1186 = vmatprep.subr.mxu0 0.0
  %1187 = vmatpush1.msra.mxu0 0.0
  %1188 = vmatprep.subr.mxu0 0.0
  %1189 = vmatpush1.msra.mxu0 0.0
  %1190 = vmatprep.subr.mxu0 0.0
  %1191 = vmatpush1.msra.mxu0 0.0
  %1192 = vmatprep.subr.mxu0 0.0
  %1193 = vmatpush1.msra.mxu0 0.0
  %1194 = vmatprep.subr.mxu0 0.0
  %1195 = vmatpush1.msra.mxu0 0.0
  %1196 = vmatprep.subr.mxu0 0.0
  %1197 = vmatpush1.msra.mxu0 0.0
  %1198 = vmatprep.subr.mxu0 0.0
  %1199 = vmatpush1.msra.mxu0 0.0
  %1200 = vmatprep.subr.mxu0 0.0
  %1201 = vmatpush1.msra.mxu0 0.0
  %1202 = vmatprep.subr.mxu0 0.0
  %1203 = vmatpush1.msra.mxu0 0.0
  %1204 = vmatprep.subr.mxu0 0.0
  %1205 = vmatpush1.msra.mxu0 0.0
  %1206 = vmatprep.subr.mxu0 0.0
  %1207 = vmatpush1.msra.mxu0 0.0
  %1208 = vmatprep.subr.mxu0 0.0
  %1209 = vmatpush1.msra.mxu0 0.0
  %1210 = vmatprep.subr.mxu0 0.0
  %1211 = vmatpush1.msra.mxu0 0.0
  %1212 = vmatprep.subr.mxu0 0.0
  %1213 = vmatpush1.msra.mxu0 0.0
  %1214 = vmatprep.subr.mxu0 0.0
  %1215 = vmatpush1.msra.mxu0 0.0
  %1216 = vmatprep.subr.mxu0 0.0
  %1217 = vmatpush1.msra.mxu0 0.0
  %1218 = vmatprep.mubr.f32.mxu0 0.0
  %1219 = vmatmul.mubr.f32.gmra.mrb[0].mxu0 %v1152
  %v1220 = vpop.f32.mrb[0].mxu0
  %v1221 = vadd.f32 0.0, %v1220
  %v1222 = vpop.f32.mrb[0].mxu0
  %1223 = vdwg.mxu0
  %v1224 = vld [vmem:[%s5] sm:$0xff]
  %v1225 = vld [vmem:[%s6] sm:$0xff]
  %v1226 = vld [vmem:[%s6 + $0x8] sm:$0xff]
  %v1227 = vld [vmem:[%s8] sm:$0xff]
  %v1228 = vld [vmem:[%s8 + $0x8] sm:$0xff]
  %1229 = vset.pattern.permute.xlu0 0
  %1230 = vperm.xlu0 %1229, %v1227
  %v1231 = vpop.permute.xlu0 %1230
  %1232 = vset.pattern.permute.xlu0 0
  %1233 = vperm.xlu0 %1232, %v1228
  %v1234 = vpop.permute.xlu0 %1233
  %vm1235 = vcmp.eq.s32.totalorder %v90, %v1231
  %vm1236 = vcmp.eq.s32.totalorder %v90, %v1234
  %v1237 = vsel %vm1235, 1, 0
  %v1238 = vsel %vm1236, 1, 0
  %v1239 = vcvt.s32.f32 %v1237
  %v1240 = vcvt.s32.f32 %v1238
  %v1241 = vld [vmem:[%s7] sm:$0xff]
  %v1242 = vld [vmem:[%s7 + $0x8] sm:$0xff]
  %1243 = vset.pattern.permute.xlu0 0
  %1244 = vperm.xlu0 %1243, %v1241
  %v1245 = vpop.permute.xlu0 %1244
  %1246 = vset.pattern.permute.xlu0 0
  %1247 = vperm.xlu0 %1246, %v1242
  %v1248 = vpop.permute.xlu0 %1247
  %vm1249 = vcmp.eq.s32.totalorder %v90, %v1245
  %vm1250 = vcmp.eq.s32.totalorder %v90, %v1248
  %v1251 = vsel %vm1249, 1, 0
  %v1252 = vsel %vm1250, 1, 0
  %v1253 = vcvt.s32.f32 %v1251
  %v1254 = vcvt.s32.f32 %v1252
  %v1256 = vsel %vm119, %v1224, 0
  %1258 = vmatprep.subr.mxu0 0.0
  %1259 = vmatpush1.msra.mxu0 %v125
  %1260 = vmatprep.subr.mxu0 0.0
  %1261 = vmatpush1.msra.mxu0 0.0
  %1262 = vmatprep.subr.mxu0 0.0
  %1263 = vmatpush1.msra.mxu0 0.0
  %1264 = vmatprep.subr.mxu0 0.0
  %1265 = vmatpush1.msra.mxu0 0.0
  %1266 = vmatprep.subr.mxu0 0.0
  %1267 = vmatpush1.msra.mxu0 0.0
  %1268 = vmatprep.subr.mxu0 0.0
  %1269 = vmatpush1.msra.mxu0 0.0
  %1270 = vmatprep.subr.mxu0 0.0
  %1271 = vmatpush1.msra.mxu0 0.0
  %1272 = vmatprep.subr.mxu0 0.0
  %1273 = vmatpush1.msra.mxu0 0.0
  %1274 = vmatprep.subr.mxu0 0.0
  %1275 = vmatpush1.msra.mxu0 0.0
  %1276 = vmatprep.subr.mxu0 0.0
  %1277 = vmatpush1.msra.mxu0 0.0
  %1278 = vmatprep.subr.mxu0 0.0
  %1279 = vmatpush1.msra.mxu0 0.0
  %1280 = vmatprep.subr.mxu0 0.0
  %1281 = vmatpush1.msra.mxu0 0.0
  %1282 = vmatprep.subr.mxu0 0.0
  %1283 = vmatpush1.msra.mxu0 0.0
  %1284 = vmatprep.subr.mxu0 0.0
  %1285 = vmatpush1.msra.mxu0 0.0
  %1286 = vmatprep.subr.mxu0 0.0
  %1287 = vmatpush1.msra.mxu0 0.0
  %1288 = vmatprep.subr.mxu0 0.0
  %1289 = vmatpush1.msra.mxu0 0.0
  %1290 = vmatprep.subr.mxu0 0.0
  %1291 = vmatpush1.msra.mxu0 0.0
  %1292 = vmatprep.subr.mxu0 0.0
  %1293 = vmatpush1.msra.mxu0 0.0
  %1294 = vmatprep.subr.mxu0 0.0
  %1295 = vmatpush1.msra.mxu0 0.0
  %1296 = vmatprep.subr.mxu0 0.0
  %1297 = vmatpush1.msra.mxu0 0.0
  %1298 = vmatprep.subr.mxu0 0.0
  %1299 = vmatpush1.msra.mxu0 0.0
  %1300 = vmatprep.subr.mxu0 0.0
  %1301 = vmatpush1.msra.mxu0 0.0
  %1302 = vmatprep.subr.mxu0 0.0
  %1303 = vmatpush1.msra.mxu0 0.0
  %1304 = vmatprep.subr.mxu0 0.0
  %1305 = vmatpush1.msra.mxu0 0.0
  %1306 = vmatprep.subr.mxu0 0.0
  %1307 = vmatpush1.msra.mxu0 0.0
  %1308 = vmatprep.subr.mxu0 0.0
  %1309 = vmatpush1.msra.mxu0 0.0
  %1310 = vmatprep.subr.mxu0 0.0
  %1311 = vmatpush1.msra.mxu0 0.0
  %1312 = vmatprep.subr.mxu0 0.0
  %1313 = vmatpush1.msra.mxu0 0.0
  %1314 = vmatprep.subr.mxu0 0.0
  %1315 = vmatpush1.msra.mxu0 0.0
  %1316 = vmatprep.subr.mxu0 0.0
  %1317 = vmatpush1.msra.mxu0 0.0
  %1318 = vmatprep.subr.mxu0 0.0
  %1319 = vmatpush1.msra.mxu0 0.0
  %1320 = vmatprep.subr.mxu0 0.0
  %1321 = vmatpush1.msra.mxu0 0.0
  %1322 = vmatprep.mubr.f32.mxu0 0.0
  %1323 = vmatmul.mubr.f32.gmra.mrb[0].mxu0 %v1256
  %v1324 = vpop.f32.mrb[0].mxu0
  %v1325 = vadd.f32 0.0, %v1324
  %v1326 = vpop.f32.mrb[0].mxu0
  %1327 = vdwg.mxu0
  %1328 = vmatprep.subr.mxu0 0.0
  %1329 = vmatpush1.msra.mxu0 %v198
  %1330 = vmatprep.subr.mxu0 0.0
  %1331 = vmatpush1.msra.mxu0 0.0
  %1332 = vmatprep.subr.mxu0 0.0
  %1333 = vmatpush1.msra.mxu0 0.0
  %1334 = vmatprep.subr.mxu0 0.0
  %1335 = vmatpush1.msra.mxu0 0.0
  %1336 = vmatprep.subr.mxu0 0.0
  %1337 = vmatpush1.msra.mxu0 0.0
  %1338 = vmatprep.subr.mxu0 0.0
  %1339 = vmatpush1.msra.mxu0 0.0
  %1340 = vmatprep.subr.mxu0 0.0
  %1341 = vmatpush1.msra.mxu0 0.0
  %1342 = vmatprep.subr.mxu0 0.0
  %1343 = vmatpush1.msra.mxu0 0.0
  %1344 = vmatprep.subr.mxu0 0.0
  %1345 = vmatpush1.msra.mxu0 0.0
  %1346 = vmatprep.subr.mxu0 0.0
  %1347 = vmatpush1.msra.mxu0 0.0
  %1348 = vmatprep.subr.mxu0 0.0
  %1349 = vmatpush1.msra.mxu0 0.0
  %1350 = vmatprep.subr.mxu0 0.0
  %1351 = vmatpush1.msra.mxu0 0.0
  %1352 = vmatprep.subr.mxu0 0.0
  %1353 = vmatpush1.msra.mxu0 0.0
  %1354 = vmatprep.subr.mxu0 0.0
  %1355 = vmatpush1.msra.mxu0 0.0
  %1356 = vmatprep.subr.mxu0 0.0
  %1357 = vmatpush1.msra.mxu0 0.0
  %1358 = vmatprep.subr.mxu0 0.0
  %1359 = vmatpush1.msra.mxu0 0.0
  %1360 = vmatprep.subr.mxu0 0.0
  %1361 = vmatpush1.msra.mxu0 0.0
  %1362 = vmatprep.subr.mxu0 0.0
  %1363 = vmatpush1.msra.mxu0 0.0
  %1364 = vmatprep.subr.mxu0 0.0
  %1365 = vmatpush1.msra.mxu0 0.0
  %1366 = vmatprep.subr.mxu0 0.0
  %1367 = vmatpush1.msra.mxu0 0.0
  %1368 = vmatprep.subr.mxu0 0.0
  %1369 = vmatpush1.msra.mxu0 0.0
  %1370 = vmatprep.subr.mxu0 0.0
  %1371 = vmatpush1.msra.mxu0 0.0
  %1372 = vmatprep.subr.mxu0 0.0
  %1373 = vmatpush1.msra.mxu0 0.0
  %1374 = vmatprep.subr.mxu0 0.0
  %1375 = vmatpush1.msra.mxu0 0.0
  %1376 = vmatprep.subr.mxu0 0.0
  %1377 = vmatpush1.msra.mxu0 0.0
  %1378 = vmatprep.subr.mxu0 0.0
  %1379 = vmatpush1.msra.mxu0 0.0
  %1380 = vmatprep.subr.mxu0 0.0
  %1381 = vmatpush1.msra.mxu0 0.0
  %1382 = vmatprep.subr.mxu0 0.0
  %1383 = vmatpush1.msra.mxu0 0.0
  %1384 = vmatprep.subr.mxu0 0.0
  %1385 = vmatpush1.msra.mxu0 0.0
  %1386 = vmatprep.subr.mxu0 0.0
  %1387 = vmatpush1.msra.mxu0 0.0
  %1388 = vmatprep.subr.mxu0 0.0
  %1389 = vmatpush1.msra.mxu0 0.0
  %1390 = vmatprep.subr.mxu0 0.0
  %1391 = vmatpush1.msra.mxu0 0.0
  %1392 = vmatprep.mubr.f32.mxu0 0.0
  %1393 = vmatmul.mubr.f32.gmra.mrb[0].mxu0 %v1256
  %v1394 = vpop.f32.mrb[0].mxu0
  %v1395 = vadd.f32 0.0, %v1394
  %v1396 = vpop.f32.mrb[0].mxu0
  %1397 = vdwg.mxu0
  %1398 = vmatprep.subr.mxu0 0.0
  %1399 = vmatpush1.msra.mxu0 %v271
  %1400 = vmatprep.subr.mxu0 0.0
  %1401 = vmatpush1.msra.mxu0 0.0
  %1402 = vmatprep.subr.mxu0 0.0
  %1403 = vmatpush1.msra.mxu0 0.0
  %1404 = vmatprep.subr.mxu0 0.0
  %1405 = vmatpush1.msra.mxu0 0.0
  %1406 = vmatprep.subr.mxu0 0.0
  %1407 = vmatpush1.msra.mxu0 0.0
  %1408 = vmatprep.subr.mxu0 0.0
  %1409 = vmatpush1.msra.mxu0 0.0
  %1410 = vmatprep.subr.mxu0 0.0
  %1411 = vmatpush1.msra.mxu0 0.0
  %1412 = vmatprep.subr.mxu0 0.0
  %1413 = vmatpush1.msra.mxu0 0.0
  %1414 = vmatprep.subr.mxu0 0.0
  %1415 = vmatpush1.msra.mxu0 0.0
  %1416 = vmatprep.subr.mxu0 0.0
  %1417 = vmatpush1.msra.mxu0 0.0
  %1418 = vmatprep.subr.mxu0 0.0
  %1419 = vmatpush1.msra.mxu0 0.0
  %1420 = vmatprep.subr.mxu0 0.0
  %1421 = vmatpush1.msra.mxu0 0.0
  %1422 = vmatprep.subr.mxu0 0.0
  %1423 = vmatpush1.msra.mxu0 0.0
  %1424 = vmatprep.subr.mxu0 0.0
  %1425 = vmatpush1.msra.mxu0 0.0
  %1426 = vmatprep.subr.mxu0 0.0
  %1427 = vmatpush1.msra.mxu0 0.0
  %1428 = vmatprep.subr.mxu0 0.0
  %1429 = vmatpush1.msra.mxu0 0.0
  %1430 = vmatprep.subr.mxu0 0.0
  %1431 = vmatpush1.msra.mxu0 0.0
  %1432 = vmatprep.subr.mxu0 0.0
  %1433 = vmatpush1.msra.mxu0 0.0
  %1434 = vmatprep.subr.mxu0 0.0
  %1435 = vmatpush1.msra.mxu0 0.0
  %1436 = vmatprep.subr.mxu0 0.0
  %1437 = vmatpush1.msra.mxu0 0.0
  %1438 = vmatprep.subr.mxu0 0.0
  %1439 = vmatpush1.msra.mxu0 0.0
  %1440 = vmatprep.subr.mxu0 0.0
  %1441 = vmatpush1.msra.mxu0 0.0
  %1442 = vmatprep.subr.mxu0 0.0
  %1443 = vmatpush1.msra.mxu0 0.0
  %1444 = vmatprep.subr.mxu0 0.0
  %1445 = vmatpush1.msra.mxu0 0.0
  %1446 = vmatprep.subr.mxu0 0.0
  %1447 = vmatpush1.msra.mxu0 0.0
  %1448 = vmatprep.subr.mxu0 0.0
  %1449 = vmatpush1.msra.mxu0 0.0
  %1450 = vmatprep.subr.mxu0 0.0
  %1451 = vmatpush1.msra.mxu0 0.0
  %1452 = vmatprep.subr.mxu0 0.0
  %1453 = vmatpush1.msra.mxu0 0.0
  %1454 = vmatprep.subr.mxu0 0.0
  %1455 = vmatpush1.msra.mxu0 0.0
  %1456 = vmatprep.subr.mxu0 0.0
  %1457 = vmatpush1.msra.mxu0 0.0
  %1458 = vmatprep.subr.mxu0 0.0
  %1459 = vmatpush1.msra.mxu0 0.0
  %1460 = vmatprep.subr.mxu0 0.0
  %1461 = vmatpush1.msra.mxu0 0.0
  %1462 = vmatprep.mubr.f32.mxu0 0.0
  %1463 = vmatmul.mubr.f32.gmra.mrb[0].mxu0 %v1256
  %v1464 = vpop.f32.mrb[0].mxu0
  %v1465 = vadd.f32 0.0, %v1464
  %v1466 = vpop.f32.mrb[0].mxu0
  %1467 = vdwg.mxu0
  %1468 = vmatprep.subr.mxu0 0.0
  %1469 = vmatpush1.msra.mxu0 %v344
  %1470 = vmatprep.subr.mxu0 0.0
  %1471 = vmatpush1.msra.mxu0 0.0
  %1472 = vmatprep.subr.mxu0 0.0
  %1473 = vmatpush1.msra.mxu0 0.0
  %1474 = vmatprep.subr.mxu0 0.0
  %1475 = vmatpush1.msra.mxu0 0.0
  %1476 = vmatprep.subr.mxu0 0.0
  %1477 = vmatpush1.msra.mxu0 0.0
  %1478 = vmatprep.subr.mxu0 0.0
  %1479 = vmatpush1.msra.mxu0 0.0
  %1480 = vmatprep.subr.mxu0 0.0
  %1481 = vmatpush1.msra.mxu0 0.0
  %1482 = vmatprep.subr.mxu0 0.0
  %1483 = vmatpush1.msra.mxu0 0.0
  %1484 = vmatprep.subr.mxu0 0.0
  %1485 = vmatpush1.msra.mxu0 0.0
  %1486 = vmatprep.subr.mxu0 0.0
  %1487 = vmatpush1.msra.mxu0 0.0
  %1488 = vmatprep.subr.mxu0 0.0
  %1489 = vmatpush1.msra.mxu0 0.0
  %1490 = vmatprep.subr.mxu0 0.0
  %1491 = vmatpush1.msra.mxu0 0.0
  %1492 = vmatprep.subr.mxu0 0.0
  %1493 = vmatpush1.msra.mxu0 0.0
  %1494 = vmatprep.subr.mxu0 0.0
  %1495 = vmatpush1.msra.mxu0 0.0
  %1496 = vmatprep.subr.mxu0 0.0
  %1497 = vmatpush1.msra.mxu0 0.0
  %1498 = vmatprep.subr.mxu0 0.0
  %1499 = vmatpush1.msra.mxu0 0.0
  %1500 = vmatprep.subr.mxu0 0.0
  %1501 = vmatpush1.msra.mxu0 0.0
  %1502 = vmatprep.subr.mxu0 0.0
  %1503 = vmatpush1.msra.mxu0 0.0
  %1504 = vmatprep.subr.mxu0 0.0
  %1505 = vmatpush1.msra.mxu0 0.0
  %1506 = vmatprep.subr.mxu0 0.0
  %1507 = vmatpush1.msra.mxu0 0.0
  %1508 = vmatprep.subr.mxu0 0.0
  %1509 = vmatpush1.msra.mxu0 0.0
  %1510 = vmatprep.subr.mxu0 0.0
  %1511 = vmatpush1.msra.mxu0 0.0
  %1512 = vmatprep.subr.mxu0 0.0
  %1513 = vmatpush1.msra.mxu0 0.0
  %1514 = vmatprep.subr.mxu0 0.0
  %1515 = vmatpush1.msra.mxu0 0.0
  %1516 = vmatprep.subr.mxu0 0.0
  %1517 = vmatpush1.msra.mxu0 0.0
  %1518 = vmatprep.subr.mxu0 0.0
  %1519 = vmatpush1.msra.mxu0 0.0
  %1520 = vmatprep.subr.mxu0 0.0
  %1521 = vmatpush1.msra.mxu0 0.0
  %1522 = vmatprep.subr.mxu0 0.0
  %1523 = vmatpush1.msra.mxu0 0.0
  %1524 = vmatprep.subr.mxu0 0.0
  %1525 = vmatpush1.msra.mxu0 0.0
  %1526 = vmatprep.subr.mxu0 0.0
  %1527 = vmatpush1.msra.mxu0 0.0
  %1528 = vmatprep.subr.mxu0 0.0
  %1529 = vmatpush1.msra.mxu0 0.0
  %1530 = vmatprep.subr.mxu0 0.0
  %1531 = vmatpush1.msra.mxu0 0.0
  %1532 = vmatprep.mubr.f32.mxu0 0.0
  %1533 = vmatmul.mubr.f32.gmra.mrb[0].mxu0 %v1256
  %v1534 = vpop.f32.mrb[0].mxu0
  %v1535 = vadd.f32 0.0, %v1534
  %v1536 = vpop.f32.mrb[0].mxu0
  %1537 = vdwg.mxu0
  %v1539 = vsel %vm119, %v1225, 0
  %v1542 = vsel %vm119, %v1226, 0
  %1544 = vmatprep.subr.mxu0 0.0
  %1545 = vmatpush1.msra.mxu0 %v429
  %1546 = vmatprep.subr.mxu0 0.0
  %1547 = vmatpush1.msra.mxu0 0.0
  %1548 = vmatprep.subr.mxu0 0.0
  %1549 = vmatpush1.msra.mxu0 0.0
  %1550 = vmatprep.subr.mxu0 0.0
  %1551 = vmatpush1.msra.mxu0 0.0
  %1552 = vmatprep.subr.mxu0 0.0
  %1553 = vmatpush1.msra.mxu0 0.0
  %1554 = vmatprep.subr.mxu0 0.0
  %1555 = vmatpush1.msra.mxu0 0.0
  %1556 = vmatprep.subr.mxu0 0.0
  %1557 = vmatpush1.msra.mxu0 0.0
  %1558 = vmatprep.subr.mxu0 0.0
  %1559 = vmatpush1.msra.mxu0 0.0
  %1560 = vmatprep.subr.mxu0 0.0
  %1561 = vmatpush1.msra.mxu0 0.0
  %1562 = vmatprep.subr.mxu0 0.0
  %1563 = vmatpush1.msra.mxu0 0.0
  %1564 = vmatprep.subr.mxu0 0.0
  %1565 = vmatpush1.msra.mxu0 0.0
  %1566 = vmatprep.subr.mxu0 0.0
  %1567 = vmatpush1.msra.mxu0 0.0
  %1568 = vmatprep.subr.mxu0 0.0
  %1569 = vmatpush1.msra.mxu0 0.0
  %1570 = vmatprep.subr.mxu0 0.0
  %1571 = vmatpush1.msra.mxu0 0.0
  %1572 = vmatprep.subr.mxu0 0.0
  %1573 = vmatpush1.msra.mxu0 0.0
  %1574 = vmatprep.subr.mxu0 0.0
  %1575 = vmatpush1.msra.mxu0 0.0
  %1576 = vmatprep.subr.mxu0 0.0
  %1577 = vmatpush1.msra.mxu0 0.0
  %1578 = vmatprep.subr.mxu0 0.0
  %1579 = vmatpush1.msra.mxu0 0.0
  %1580 = vmatprep.subr.mxu0 0.0
  %1581 = vmatpush1.msra.mxu0 0.0
  %1582 = vmatprep.subr.mxu0 0.0
  %1583 = vmatpush1.msra.mxu0 0.0
  %1584 = vmatprep.subr.mxu0 0.0
  %1585 = vmatpush1.msra.mxu0 0.0
  %1586 = vmatprep.subr.mxu0 0.0
  %1587 = vmatpush1.msra.mxu0 0.0
  %1588 = vmatprep.subr.mxu0 0.0
  %1589 = vmatpush1.msra.mxu0 0.0
  %1590 = vmatprep.subr.mxu0 0.0
  %1591 = vmatpush1.msra.mxu0 0.0
  %1592 = vmatprep.subr.mxu0 0.0
  %1593 = vmatpush1.msra.mxu0 0.0
  %1594 = vmatprep.subr.mxu0 0.0
  %1595 = vmatpush1.msra.mxu0 0.0
  %1596 = vmatprep.subr.mxu0 0.0
  %1597 = vmatpush1.msra.mxu0 0.0
  %1598 = vmatprep.subr.mxu0 0.0
  %1599 = vmatpush1.msra.mxu0 0.0
  %1600 = vmatprep.subr.mxu0 0.0
  %1601 = vmatpush1.msra.mxu0 0.0
  %1602 = vmatprep.subr.mxu0 0.0
  %1603 = vmatpush1.msra.mxu0 0.0
  %1604 = vmatprep.subr.mxu0 0.0
  %1605 = vmatpush1.msra.mxu0 0.0
  %1606 = vmatprep.subr.mxu0 0.0
  %1607 = vmatpush1.msra.mxu0 0.0
  %1608 = vmatprep.mubr.f32.mxu0 0.0
  %1609 = vmatmul.mubr.f32.gmra.mrb[0].mxu0 %v1539
  %v1610 = vpop.f32.mrb[0].mxu0
  %v1611 = vadd.f32 %v420, %v1610
  %v1612 = vpop.f32.mrb[0].mxu0
  %1613 = vmatprep.mubr.f32.mxu0 0.0
  %1614 = vmatmul.mubr.f32.gmra.mrb[0].mxu0 %v1542
  %v1615 = vpop.f32.mrb[0].mxu0
  %v1616 = vadd.f32 %v420, %v1615
  %v1617 = vpop.f32.mrb[0].mxu0
  %1618 = vdwg.mxu0
  %1619 = vmatprep.subr.mxu0 0.0
  %1620 = vmatpush1.msra.mxu0 %v513
  %1621 = vmatprep.subr.mxu0 0.0
  %1622 = vmatpush1.msra.mxu0 0.0
  %1623 = vmatprep.subr.mxu0 0.0
  %1624 = vmatpush1.msra.mxu0 0.0
  %1625 = vmatprep.subr.mxu0 0.0
  %1626 = vmatpush1.msra.mxu0 0.0
  %1627 = vmatprep.subr.mxu0 0.0
  %1628 = vmatpush1.msra.mxu0 0.0
  %1629 = vmatprep.subr.mxu0 0.0
  %1630 = vmatpush1.msra.mxu0 0.0
  %1631 = vmatprep.subr.mxu0 0.0
  %1632 = vmatpush1.msra.mxu0 0.0
  %1633 = vmatprep.subr.mxu0 0.0
  %1634 = vmatpush1.msra.mxu0 0.0
  %1635 = vmatprep.subr.mxu0 0.0
  %1636 = vmatpush1.msra.mxu0 0.0
  %1637 = vmatprep.subr.mxu0 0.0
  %1638 = vmatpush1.msra.mxu0 0.0
  %1639 = vmatprep.subr.mxu0 0.0
  %1640 = vmatpush1.msra.mxu0 0.0
  %1641 = vmatprep.subr.mxu0 0.0
  %1642 = vmatpush1.msra.mxu0 0.0
  %1643 = vmatprep.subr.mxu0 0.0
  %1644 = vmatpush1.msra.mxu0 0.0
  %1645 = vmatprep.subr.mxu0 0.0
  %1646 = vmatpush1.msra.mxu0 0.0
  %1647 = vmatprep.subr.mxu0 0.0
  %1648 = vmatpush1.msra.mxu0 0.0
  %1649 = vmatprep.subr.mxu0 0.0
  %1650 = vmatpush1.msra.mxu0 0.0
  %1651 = vmatprep.subr.mxu0 0.0
  %1652 = vmatpush1.msra.mxu0 0.0
  %1653 = vmatprep.subr.mxu0 0.0
  %1654 = vmatpush1.msra.mxu0 0.0
  %1655 = vmatprep.subr.mxu0 0.0
  %1656 = vmatpush1.msra.mxu0 0.0
  %1657 = vmatprep.subr.mxu0 0.0
  %1658 = vmatpush1.msra.mxu0 0.0
  %1659 = vmatprep.subr.mxu0 0.0
  %1660 = vmatpush1.msra.mxu0 0.0
  %1661 = vmatprep.subr.mxu0 0.0
  %1662 = vmatpush1.msra.mxu0 0.0
  %1663 = vmatprep.subr.mxu0 0.0
  %1664 = vmatpush1.msra.mxu0 0.0
  %1665 = vmatprep.subr.mxu0 0.0
  %1666 = vmatpush1.msra.mxu0 0.0
  %1667 = vmatprep.subr.mxu0 0.0
  %1668 = vmatpush1.msra.mxu0 0.0
  %1669 = vmatprep.subr.mxu0 0.0
  %1670 = vmatpush1.msra.mxu0 0.0
  %1671 = vmatprep.subr.mxu0 0.0
  %1672 = vmatpush1.msra.mxu0 0.0
  %1673 = vmatprep.subr.mxu0 0.0
  %1674 = vmatpush1.msra.mxu0 0.0
  %1675 = vmatprep.subr.mxu0 0.0
  %1676 = vmatpush1.msra.mxu0 0.0
  %1677 = vmatprep.subr.mxu0 0.0
  %1678 = vmatpush1.msra.mxu0 0.0
  %1679 = vmatprep.subr.mxu0 0.0
  %1680 = vmatpush1.msra.mxu0 0.0
  %1681 = vmatprep.subr.mxu0 0.0
  %1682 = vmatpush1.msra.mxu0 0.0
  %1683 = vmatprep.mubr.f32.mxu0 0.0
  %1684 = vmatmul.mubr.f32.gmra.mrb[0].mxu0 %v1539
  %v1685 = vpop.f32.mrb[0].mxu0
  %v1686 = vadd.f32 %v510, %v1685
  %v1687 = vpop.f32.mrb[0].mxu0
  %1688 = vmatprep.mubr.f32.mxu0 0.0
  %1689 = vmatmul.mubr.f32.gmra.mrb[0].mxu0 %v1542
  %v1690 = vpop.f32.mrb[0].mxu0
  %v1691 = vadd.f32 %v510, %v1690
  %v1692 = vpop.f32.mrb[0].mxu0
  %1693 = vdwg.mxu0
  %v1695 = vsel %vm590, %v1253, 0
  %v1698 = vsel %vm590, %v1254, 0
  %1700 = vmatprep.subr.mxu0 0.0
  %1701 = vmatpush1.msra.mxu0 %v1395
  %1702 = vmatprep.subr.mxu0 0.0
  %1703 = vmatpush1.msra.mxu0 0.0
  %1704 = vmatprep.subr.mxu0 0.0
  %1705 = vmatpush1.msra.mxu0 0.0
  %1706 = vmatprep.subr.mxu0 0.0
  %1707 = vmatpush1.msra.mxu0 0.0
  %1708 = vmatprep.subr.mxu0 0.0
  %1709 = vmatpush1.msra.mxu0 0.0
  %1710 = vmatprep.subr.mxu0 0.0
  %1711 = vmatpush1.msra.mxu0 0.0
  %1712 = vmatprep.subr.mxu0 0.0
  %1713 = vmatpush1.msra.mxu0 0.0
  %1714 = vmatprep.subr.mxu0 0.0
  %1715 = vmatpush1.msra.mxu0 0.0
  %1716 = vmatprep.subr.mxu0 0.0
  %1717 = vmatpush1.msra.mxu0 0.0
  %1718 = vmatprep.subr.mxu0 0.0
  %1719 = vmatpush1.msra.mxu0 0.0
  %1720 = vmatprep.subr.mxu0 0.0
  %1721 = vmatpush1.msra.mxu0 0.0
  %1722 = vmatprep.subr.mxu0 0.0
  %1723 = vmatpush1.msra.mxu0 0.0
  %1724 = vmatprep.subr.mxu0 0.0
  %1725 = vmatpush1.msra.mxu0 0.0
  %1726 = vmatprep.subr.mxu0 0.0
  %1727 = vmatpush1.msra.mxu0 0.0
  %1728 = vmatprep.subr.mxu0 0.0
  %1729 = vmatpush1.msra.mxu0 0.0
  %1730 = vmatprep.subr.mxu0 0.0
  %1731 = vmatpush1.msra.mxu0 0.0
  %1732 = vmatprep.subr.mxu0 0.0
  %1733 = vmatpush1.msra.mxu0 0.0
  %1734 = vmatprep.subr.mxu0 0.0
  %1735 = vmatpush1.msra.mxu0 0.0
  %1736 = vmatprep.subr.mxu0 0.0
  %1737 = vmatpush1.msra.mxu0 0.0
  %1738 = vmatprep.subr.mxu0 0.0
  %1739 = vmatpush1.msra.mxu0 0.0
  %1740 = vmatprep.subr.mxu0 0.0
  %1741 = vmatpush1.msra.mxu0 0.0
  %1742 = vmatprep.subr.mxu0 0.0
  %1743 = vmatpush1.msra.mxu0 0.0
  %1744 = vmatprep.subr.mxu0 0.0
  %1745 = vmatpush1.msra.mxu0 0.0
  %1746 = vmatprep.subr.mxu0 0.0
  %1747 = vmatpush1.msra.mxu0 0.0
  %1748 = vmatprep.subr.mxu0 0.0
  %1749 = vmatpush1.msra.mxu0 0.0
  %1750 = vmatprep.subr.mxu0 0.0
  %1751 = vmatpush1.msra.mxu0 0.0
  %1752 = vmatprep.subr.mxu0 0.0
  %1753 = vmatpush1.msra.mxu0 0.0
  %1754 = vmatprep.subr.mxu0 0.0
  %1755 = vmatpush1.msra.mxu0 0.0
  %1756 = vmatprep.subr.mxu0 0.0
  %1757 = vmatpush1.msra.mxu0 0.0
  %1758 = vmatprep.subr.mxu0 0.0
  %1759 = vmatpush1.msra.mxu0 0.0
  %1760 = vmatprep.subr.mxu0 0.0
  %1761 = vmatpush1.msra.mxu0 0.0
  %1762 = vmatprep.subr.mxu0 0.0
  %1763 = vmatpush1.msra.mxu0 0.0
  %1764 = vmatprep.mubr.f32.mxu0 0.0
  %1765 = vmatmul.mubr.f32.gmra.mrb[0].mxu0 %v1695
  %v1766 = vpop.f32.mrb[0].mxu0
  %v1767 = vadd.f32 0.0, %v1766
  %v1768 = vpop.f32.mrb[0].mxu0
  %1769 = vmatprep.mubr.f32.mxu0 0.0
  %1770 = vmatmul.mubr.f32.gmra.mrb[0].mxu0 %v1698
  %v1771 = vpop.f32.mrb[0].mxu0
  %v1772 = vadd.f32 0.0, %v1771
  %v1773 = vpop.f32.mrb[0].mxu0
  %1774 = vdwg.mxu0
  %v1776 = vsel %vm590, %v1239, 0
  %v1779 = vsel %vm590, %v1240, 0
  %1781 = vmatprep.subr.mxu0 0.0
  %1782 = vmatpush1.msra.mxu0 %v1325
  %1783 = vmatprep.subr.mxu0 0.0
  %1784 = vmatpush1.msra.mxu0 0.0
  %1785 = vmatprep.subr.mxu0 0.0
  %1786 = vmatpush1.msra.mxu0 0.0
  %1787 = vmatprep.subr.mxu0 0.0
  %1788 = vmatpush1.msra.mxu0 0.0
  %1789 = vmatprep.subr.mxu0 0.0
  %1790 = vmatpush1.msra.mxu0 0.0
  %1791 = vmatprep.subr.mxu0 0.0
  %1792 = vmatpush1.msra.mxu0 0.0
  %1793 = vmatprep.subr.mxu0 0.0
  %1794 = vmatpush1.msra.mxu0 0.0
  %1795 = vmatprep.subr.mxu0 0.0
  %1796 = vmatpush1.msra.mxu0 0.0
  %1797 = vmatprep.subr.mxu0 0.0
  %1798 = vmatpush1.msra.mxu0 0.0
  %1799 = vmatprep.subr.mxu0 0.0
  %1800 = vmatpush1.msra.mxu0 0.0
  %1801 = vmatprep.subr.mxu0 0.0
  %1802 = vmatpush1.msra.mxu0 0.0
  %1803 = vmatprep.subr.mxu0 0.0
  %1804 = vmatpush1.msra.mxu0 0.0
  %1805 = vmatprep.subr.mxu0 0.0
  %1806 = vmatpush1.msra.mxu0 0.0
  %1807 = vmatprep.subr.mxu0 0.0
  %1808 = vmatpush1.msra.mxu0 0.0
  %1809 = vmatprep.subr.mxu0 0.0
  %1810 = vmatpush1.msra.mxu0 0.0
  %1811 = vmatprep.subr.mxu0 0.0
  %1812 = vmatpush1.msra.mxu0 0.0
  %1813 = vmatprep.subr.mxu0 0.0
  %1814 = vmatpush1.msra.mxu0 0.0
  %1815 = vmatprep.subr.mxu0 0.0
  %1816 = vmatpush1.msra.mxu0 0.0
  %1817 = vmatprep.subr.mxu0 0.0
  %1818 = vmatpush1.msra.mxu0 0.0
  %1819 = vmatprep.subr.mxu0 0.0
  %1820 = vmatpush1.msra.mxu0 0.0
  %1821 = vmatprep.subr.mxu0 0.0
  %1822 = vmatpush1.msra.mxu0 0.0
  %1823 = vmatprep.subr.mxu0 0.0
  %1824 = vmatpush1.msra.mxu0 0.0
  %1825 = vmatprep.subr.mxu0 0.0
  %1826 = vmatpush1.msra.mxu0 0.0
  %1827 = vmatprep.subr.mxu0 0.0
  %1828 = vmatpush1.msra.mxu0 0.0
  %1829 = vmatprep.subr.mxu0 0.0
  %1830 = vmatpush1.msra.mxu0 0.0
  %1831 = vmatprep.subr.mxu0 0.0
  %1832 = vmatpush1.msra.mxu0 0.0
  %1833 = vmatprep.subr.mxu0 0.0
  %1834 = vmatpush1.msra.mxu0 0.0
  %1835 = vmatprep.subr.mxu0 0.0
  %1836 = vmatpush1.msra.mxu0 0.0
  %1837 = vmatprep.subr.mxu0 0.0
  %1838 = vmatpush1.msra.mxu0 0.0
  %1839 = vmatprep.subr.mxu0 0.0
  %1840 = vmatpush1.msra.mxu0 0.0
  %1841 = vmatprep.subr.mxu0 0.0
  %1842 = vmatpush1.msra.mxu0 0.0
  %1843 = vmatprep.subr.mxu0 0.0
  %1844 = vmatpush1.msra.mxu0 0.0
  %1845 = vmatprep.mubr.f32.mxu0 0.0
  %1846 = vmatmul.mubr.f32.gmra.mrb[0].mxu0 %v1776
  %v1847 = vpop.f32.mrb[0].mxu0
  %v1848 = vadd.f32 %v1767, %v1847
  %v1849 = vpop.f32.mrb[0].mxu0
  %1850 = vmatprep.mubr.f32.mxu0 0.0
  %1851 = vmatmul.mubr.f32.gmra.mrb[0].mxu0 %v1779
  %v1852 = vpop.f32.mrb[0].mxu0
  %v1853 = vadd.f32 %v1772, %v1852
  %v1854 = vpop.f32.mrb[0].mxu0
  %1855 = vdwg.mxu0
  %v1856 = vadd.f32 %v1848, %v1611
  %v1857 = vadd.f32 %v1853, %v1616
  %1858 = vmatprep.subr.mxu0 0.0
  %1859 = vmatpush1.msra.mxu0 %v1535
  %1860 = vmatprep.subr.mxu0 0.0
  %1861 = vmatpush1.msra.mxu0 0.0
  %1862 = vmatprep.subr.mxu0 0.0
  %1863 = vmatpush1.msra.mxu0 0.0
  %1864 = vmatprep.subr.mxu0 0.0
  %1865 = vmatpush1.msra.mxu0 0.0
  %1866 = vmatprep.subr.mxu0 0.0
  %1867 = vmatpush1.msra.mxu0 0.0
  %1868 = vmatprep.subr.mxu0 0.0
  %1869 = vmatpush1.msra.mxu0 0.0
  %1870 = vmatprep.subr.mxu0 0.0
  %1871 = vmatpush1.msra.mxu0 0.0
  %1872 = vmatprep.subr.mxu0 0.0
  %1873 = vmatpush1.msra.mxu0 0.0
  %1874 = vmatprep.subr.mxu0 0.0
  %1875 = vmatpush1.msra.mxu0 0.0
  %1876 = vmatprep.subr.mxu0 0.0
  %1877 = vmatpush1.msra.mxu0 0.0
  %1878 = vmatprep.subr.mxu0 0.0
  %1879 = vmatpush1.msra.mxu0 0.0
  %1880 = vmatprep.subr.mxu0 0.0
  %1881 = vmatpush1.msra.mxu0 0.0
  %1882 = vmatprep.subr.mxu0 0.0
  %1883 = vmatpush1.msra.mxu0 0.0
  %1884 = vmatprep.subr.mxu0 0.0
  %1885 = vmatpush1.msra.mxu0 0.0
  %1886 = vmatprep.subr.mxu0 0.0
  %1887 = vmatpush1.msra.mxu0 0.0
  %1888 = vmatprep.subr.mxu0 0.0
  %1889 = vmatpush1.msra.mxu0 0.0
  %1890 = vmatprep.subr.mxu0 0.0
  %1891 = vmatpush1.msra.mxu0 0.0
  %1892 = vmatprep.subr.mxu0 0.0
  %1893 = vmatpush1.msra.mxu0 0.0
  %1894 = vmatprep.subr.mxu0 0.0
  %1895 = vmatpush1.msra.mxu0 0.0
  %1896 = vmatprep.subr.mxu0 0.0
  %1897 = vmatpush1.msra.mxu0 0.0
  %1898 = vmatprep.subr.mxu0 0.0
  %1899 = vmatpush1.msra.mxu0 0.0
  %1900 = vmatprep.subr.mxu0 0.0
  %1901 = vmatpush1.msra.mxu0 0.0
  %1902 = vmatprep.subr.mxu0 0.0
  %1903 = vmatpush1.msra.mxu0 0.0
  %1904 = vmatprep.subr.mxu0 0.0
  %1905 = vmatpush1.msra.mxu0 0.0
  %1906 = vmatprep.subr.mxu0 0.0
  %1907 = vmatpush1.msra.mxu0 0.0
  %1908 = vmatprep.subr.mxu0 0.0
  %1909 = vmatpush1.msra.mxu0 0.0
  %1910 = vmatprep.subr.mxu0 0.0
  %1911 = vmatpush1.msra.mxu0 0.0
  %1912 = vmatprep.subr.mxu0 0.0
  %1913 = vmatpush1.msra.mxu0 0.0
  %1914 = vmatprep.subr.mxu0 0.0
  %1915 = vmatpush1.msra.mxu0 0.0
  %1916 = vmatprep.subr.mxu0 0.0
  %1917 = vmatpush1.msra.mxu0 0.0
  %1918 = vmatprep.subr.mxu0 0.0
  %1919 = vmatpush1.msra.mxu0 0.0
  %1920 = vmatprep.subr.mxu0 0.0
  %1921 = vmatpush1.msra.mxu0 0.0
  %1922 = vmatprep.mubr.f32.mxu0 0.0
  %1923 = vmatmul.mubr.f32.gmra.mrb[0].mxu0 %v1695
  %v1924 = vpop.f32.mrb[0].mxu0
  %v1925 = vadd.f32 0.0, %v1924
  %v1926 = vpop.f32.mrb[0].mxu0
  %1927 = vmatprep.mubr.f32.mxu0 0.0
  %1928 = vmatmul.mubr.f32.gmra.mrb[0].mxu0 %v1698
  %v1929 = vpop.f32.mrb[0].mxu0
  %v1930 = vadd.f32 0.0, %v1929
  %v1931 = vpop.f32.mrb[0].mxu0
  %1932 = vdwg.mxu0
  %1933 = vmatprep.subr.mxu0 0.0
  %1934 = vmatpush1.msra.mxu0 %v1465
  %1935 = vmatprep.subr.mxu0 0.0
  %1936 = vmatpush1.msra.mxu0 0.0
  %1937 = vmatprep.subr.mxu0 0.0
  %1938 = vmatpush1.msra.mxu0 0.0
  %1939 = vmatprep.subr.mxu0 0.0
  %1940 = vmatpush1.msra.mxu0 0.0
  %1941 = vmatprep.subr.mxu0 0.0
  %1942 = vmatpush1.msra.mxu0 0.0
  %1943 = vmatprep.subr.mxu0 0.0
  %1944 = vmatpush1.msra.mxu0 0.0
  %1945 = vmatprep.subr.mxu0 0.0
  %1946 = vmatpush1.msra.mxu0 0.0
  %1947 = vmatprep.subr.mxu0 0.0
  %1948 = vmatpush1.msra.mxu0 0.0
  %1949 = vmatprep.subr.mxu0 0.0
  %1950 = vmatpush1.msra.mxu0 0.0
  %1951 = vmatprep.subr.mxu0 0.0
  %1952 = vmatpush1.msra.mxu0 0.0
  %1953 = vmatprep.subr.mxu0 0.0
  %1954 = vmatpush1.msra.mxu0 0.0
  %1955 = vmatprep.subr.mxu0 0.0
  %1956 = vmatpush1.msra.mxu0 0.0
  %1957 = vmatprep.subr.mxu0 0.0
  %1958 = vmatpush1.msra.mxu0 0.0
  %1959 = vmatprep.subr.mxu0 0.0
  %1960 = vmatpush1.msra.mxu0 0.0
  %1961 = vmatprep.subr.mxu0 0.0
  %1962 = vmatpush1.msra.mxu0 0.0
  %1963 = vmatprep.subr.mxu0 0.0
  %1964 = vmatpush1.msra.mxu0 0.0
  %1965 = vmatprep.subr.mxu0 0.0
  %1966 = vmatpush1.msra.mxu0 0.0
  %1967 = vmatprep.subr.mxu0 0.0
  %1968 = vmatpush1.msra.mxu0 0.0
  %1969 = vmatprep.subr.mxu0 0.0
  %1970 = vmatpush1.msra.mxu0 0.0
  %1971 = vmatprep.subr.mxu0 0.0
  %1972 = vmatpush1.msra.mxu0 0.0
  %1973 = vmatprep.subr.mxu0 0.0
  %1974 = vmatpush1.msra.mxu0 0.0
  %1975 = vmatprep.subr.mxu0 0.0
  %1976 = vmatpush1.msra.mxu0 0.0
  %1977 = vmatprep.subr.mxu0 0.0
  %1978 = vmatpush1.msra.mxu0 0.0
  %1979 = vmatprep.subr.mxu0 0.0
  %1980 = vmatpush1.msra.mxu0 0.0
  %1981 = vmatprep.subr.mxu0 0.0
  %1982 = vmatpush1.msra.mxu0 0.0
  %1983 = vmatprep.subr.mxu0 0.0
  %1984 = vmatpush1.msra.mxu0 0.0
  %1985 = vmatprep.subr.mxu0 0.0
  %1986 = vmatpush1.msra.mxu0 0.0
  %1987 = vmatprep.subr.mxu0 0.0
  %1988 = vmatpush1.msra.mxu0 0.0
  %1989 = vmatprep.subr.mxu0 0.0
  %1990 = vmatpush1.msra.mxu0 0.0
  %1991 = vmatprep.subr.mxu0 0.0
  %1992 = vmatpush1.msra.mxu0 0.0
  %1993 = vmatprep.subr.mxu0 0.0
  %1994 = vmatpush1.msra.mxu0 0.0
  %1995 = vmatprep.subr.mxu0 0.0
  %1996 = vmatpush1.msra.mxu0 0.0
  %1997 = vmatprep.mubr.f32.mxu0 0.0
  %1998 = vmatmul.mubr.f32.gmra.mrb[0].mxu0 %v1776
  %v1999 = vpop.f32.mrb[0].mxu0
  %v2000 = vadd.f32 %v1925, %v1999
  %v2001 = vpop.f32.mrb[0].mxu0
  %2002 = vmatprep.mubr.f32.mxu0 0.0
  %2003 = vmatmul.mubr.f32.gmra.mrb[0].mxu0 %v1779
  %v2004 = vpop.f32.mrb[0].mxu0
  %v2005 = vadd.f32 %v1930, %v2004
  %v2006 = vpop.f32.mrb[0].mxu0
  %2007 = vdwg.mxu0
  %v2008 = vadd.f32 %v2000, %v1686
  %v2009 = vadd.f32 %v2005, %v1691
  %v2010 = vxor.u32 %v1856, 2147483648
  %v2011 = vxor.u32 %v1857, 2147483648
  %v2012 = vmul.f32 %v2010, 1.442695
  %v2013 = vpow.pop %v2012
  %v2014 = vmul.f32 %v2011, 1.442695
  %v2015 = vpow.pop %v2014
  %v2016 = vadd.f32 %v2013, 1.0
  %v2017 = vadd.f32 %v2015, 1.0
  %v2018 = vrcp.pop %v2016
  %v2019 = vmul.f32 1.0, %v2018
  %v2020 = vrcp.pop %v2017
  %v2021 = vmul.f32 1.0, %v2020
  %v2022 = vand.u32 2147483647, %v2008
  %v2023 = vand.u32 2147483647, %v2009
  %v2024 = vsub.f32 0.0, %v2022
  %v2025 = vsub.f32 0.0, %v2023
  %v2026 = vmul.f32 %v2024, 1.442695
  %v2027 = vpow.pop %v2026
  %v2028 = vmul.f32 %v2025, 1.442695
  %v2029 = vpow.pop %v2028
  %v2030 = vadd.f32 %v2027, 1.0
  %v2031 = vlog2.pop %v2030
  %v2032 = vmul.f32 %v2031, 0.6931472
  %v2033 = vmul.f32 -0.5, %v2027
  %v2034 = vadd.f32 %v2033, 1.0
  %v2035 = vmul.f32 %v2034, %v2027
  %v2036 = vand.u32 2147483647, %v2027
  %vm2037 = vcmp.lt.f32.partialorder %v2036, 0.0004427343
  %v2038 = vsel %vm2037, %v2035, %v2032
  %v2039 = vadd.f32 %v2029, 1.0
  %v2040 = vlog2.pop %v2039
  %v2041 = vmul.f32 %v2040, 0.6931472
  %v2042 = vmul.f32 -0.5, %v2029
  %v2043 = vadd.f32 %v2042, 1.0
  %v2044 = vmul.f32 %v2043, %v2029
  %v2045 = vand.u32 2147483647, %v2029
  %vm2046 = vcmp.lt.f32.partialorder %v2045, 0.0004427343
  %v2047 = vsel %vm2046, %v2044, %v2041
  %v2048 = vmax.f32 %v2008, 0.0
  %v2049 = vmax.f32 %v2009, 0.0
  %v2050 = vadd.f32 %v2038, %v2048
  %v2051 = vadd.f32 %v2047, %v2049
  %v2052 = vmul.f32 %v2019, %v2050
  %v2053 = vmul.f32 %v2021, %v2051
  %2054 = vxpose.xlu0.b32.start [1/16] %v1239, 128
  %2055 = vxpose.xlu0.b32.cont [2/16] %v1240, 128
  %2056 = vxpose.xlu0.b32.cont [3/16] 0.0, 128
  %2057 = vxpose.xlu0.b32.cont [4/16] 0.0, 128
  %2058 = vxpose.xlu0.b32.cont [5/16] 0.0, 128
  %2059 = vxpose.xlu0.b32.cont [6/16] 0.0, 128
  %2060 = vxpose.xlu0.b32.cont [7/16] 0.0, 128
  %2061 = vxpose.xlu0.b32.cont [8/16] 0.0, 128
  %2062 = vxpose.xlu0.b32.cont [9/16] 0.0, 128
  %2063 = vxpose.xlu0.b32.cont [10/16] 0.0, 128
  %2064 = vxpose.xlu0.b32.cont [11/16] 0.0, 128
  %2065 = vxpose.xlu0.b32.cont [12/16] 0.0, 128
  %2066 = vxpose.xlu0.b32.cont [13/16] 0.0, 128
  %2067 = vxpose.xlu0.b32.cont [14/16] 0.0, 128
  %2068 = vxpose.xlu0.b32.cont [15/16] 0.0, 128
  %2069 = vxpose.xlu0.b32.end [16/16] 0.0, 128
  %v2070 = vpop.trf.xlu0
  %v2071 = vpop.trf.xlu0
  %v2072 = vpop.trf.xlu0
  %v2073 = vpop.trf.xlu0
  %v2074 = vpop.trf.xlu0
  %v2075 = vpop.trf.xlu0
  %v2076 = vpop.trf.xlu0
  %v2077 = vpop.trf.xlu0
  %v2078 = vpop.trf.xlu0
  %v2079 = vpop.trf.xlu0
  %v2080 = vpop.trf.xlu0
  %v2081 = vpop.trf.xlu0
  %v2082 = vpop.trf.xlu0
  %v2083 = vpop.trf.xlu0
  %v2084 = vpop.trf.xlu0
  %v2085 = vpop.trf.xlu0
  %v2087 = vsel %vm983, %v2070, 0
  %2089 = vmatprep.subr.mxu0 0.0
  %2090 = vmatpush1.msra.mxu0 %v2052
  %2091 = vmatprep.subr.mxu0 0.0
  %2092 = vmatpush1.msra.mxu0 %v2053
  %2093 = vmatprep.subr.mxu0 0.0
  %2094 = vmatpush1.msra.mxu0 0.0
  %2095 = vmatprep.subr.mxu0 0.0
  %2096 = vmatpush1.msra.mxu0 0.0
  %2097 = vmatprep.subr.mxu0 0.0
  %2098 = vmatpush1.msra.mxu0 0.0
  %2099 = vmatprep.subr.mxu0 0.0
  %2100 = vmatpush1.msra.mxu0 0.0
  %2101 = vmatprep.subr.mxu0 0.0
  %2102 = vmatpush1.msra.mxu0 0.0
  %2103 = vmatprep.subr.mxu0 0.0
  %2104 = vmatpush1.msra.mxu0 0.0
  %2105 = vmatprep.subr.mxu0 0.0
  %2106 = vmatpush1.msra.mxu0 0.0
  %2107 = vmatprep.subr.mxu0 0.0
  %2108 = vmatpush1.msra.mxu0 0.0
  %2109 = vmatprep.subr.mxu0 0.0
  %2110 = vmatpush1.msra.mxu0 0.0
  %2111 = vmatprep.subr.mxu0 0.0
  %2112 = vmatpush1.msra.mxu0 0.0
  %2113 = vmatprep.subr.mxu0 0.0
  %2114 = vmatpush1.msra.mxu0 0.0
  %2115 = vmatprep.subr.mxu0 0.0
  %2116 = vmatpush1.msra.mxu0 0.0
  %2117 = vmatprep.subr.mxu0 0.0
  %2118 = vmatpush1.msra.mxu0 0.0
  %2119 = vmatprep.subr.mxu0 0.0
  %2120 = vmatpush1.msra.mxu0 0.0
  %2121 = vmatprep.subr.mxu0 0.0
  %2122 = vmatpush1.msra.mxu0 0.0
  %2123 = vmatprep.subr.mxu0 0.0
  %2124 = vmatpush1.msra.mxu0 0.0
  %2125 = vmatprep.subr.mxu0 0.0
  %2126 = vmatpush1.msra.mxu0 0.0
  %2127 = vmatprep.subr.mxu0 0.0
  %2128 = vmatpush1.msra.mxu0 0.0
  %2129 = vmatprep.subr.mxu0 0.0
  %2130 = vmatpush1.msra.mxu0 0.0
  %2131 = vmatprep.subr.mxu0 0.0
  %2132 = vmatpush1.msra.mxu0 0.0
  %2133 = vmatprep.subr.mxu0 0.0
  %2134 = vmatpush1.msra.mxu0 0.0
  %2135 = vmatprep.subr.mxu0 0.0
  %2136 = vmatpush1.msra.mxu0 0.0
  %2137 = vmatprep.subr.mxu0 0.0
  %2138 = vmatpush1.msra.mxu0 0.0
  %2139 = vmatprep.subr.mxu0 0.0
  %2140 = vmatpush1.msra.mxu0 0.0
  %2141 = vmatprep.subr.mxu0 0.0
  %2142 = vmatpush1.msra.mxu0 0.0
  %2143 = vmatprep.subr.mxu0 0.0
  %2144 = vmatpush1.msra.mxu0 0.0
  %2145 = vmatprep.subr.mxu0 0.0
  %2146 = vmatpush1.msra.mxu0 0.0
  %2147 = vmatprep.subr.mxu0 0.0
  %2148 = vmatpush1.msra.mxu0 0.0
  %2149 = vmatprep.subr.mxu0 0.0
  %2150 = vmatpush1.msra.mxu0 0.0
  %2151 = vmatprep.subr.mxu0 0.0
  %2152 = vmatpush1.msra.mxu0 0.0
  %2153 = vmatprep.mubr.f32.mxu0 0.0
  %2154 = vmatmul.mubr.f32.gmra.mrb[0].mxu0 %v2087
  %v2155 = vpop.f32.mrb[0].mxu0
  %v2156 = vadd.f32 0.0, %v2155
  %v2157 = vpop.f32.mrb[0].mxu0
  %2158 = vdwg.mxu0
  %v2159 = vadd.f32 %v1224, %v2156
  %v2161 = vsel %vm119, %v2159, 0
  %2163 = vmatprep.subr.mxu0 0.0
  %2164 = vmatpush1.msra.mxu0 %v1068
  %2165 = vmatprep.subr.mxu0 0.0
  %2166 = vmatpush1.msra.mxu0 0.0
  %2167 = vmatprep.subr.mxu0 0.0
  %2168 = vmatpush1.msra.mxu0 0.0
  %2169 = vmatprep.subr.mxu0 0.0
  %2170 = vmatpush1.msra.mxu0 0.0
  %2171 = vmatprep.subr.mxu0 0.0
  %2172 = vmatpush1.msra.mxu0 0.0
  %2173 = vmatprep.subr.mxu0 0.0
  %2174 = vmatpush1.msra.mxu0 0.0
  %2175 = vmatprep.subr.mxu0 0.0
  %2176 = vmatpush1.msra.mxu0 0.0
  %2177 = vmatprep.subr.mxu0 0.0
  %2178 = vmatpush1.msra.mxu0 0.0
  %2179 = vmatprep.subr.mxu0 0.0
  %2180 = vmatpush1.msra.mxu0 0.0
  %2181 = vmatprep.subr.mxu0 0.0
  %2182 = vmatpush1.msra.mxu0 0.0
  %2183 = vmatprep.subr.mxu0 0.0
  %2184 = vmatpush1.msra.mxu0 0.0
  %2185 = vmatprep.subr.mxu0 0.0
  %2186 = vmatpush1.msra.mxu0 0.0
  %2187 = vmatprep.subr.mxu0 0.0
  %2188 = vmatpush1.msra.mxu0 0.0
  %2189 = vmatprep.subr.mxu0 0.0
  %2190 = vmatpush1.msra.mxu0 0.0
  %2191 = vmatprep.subr.mxu0 0.0
  %2192 = vmatpush1.msra.mxu0 0.0
  %2193 = vmatprep.subr.mxu0 0.0
  %2194 = vmatpush1.msra.mxu0 0.0
  %2195 = vmatprep.subr.mxu0 0.0
  %2196 = vmatpush1.msra.mxu0 0.0
  %2197 = vmatprep.subr.mxu0 0.0
  %2198 = vmatpush1.msra.mxu0 0.0
  %2199 = vmatprep.subr.mxu0 0.0
  %2200 = vmatpush1.msra.mxu0 0.0
  %2201 = vmatprep.subr.mxu0 0.0
  %2202 = vmatpush1.msra.mxu0 0.0
  %2203 = vmatprep.subr.mxu0 0.0
  %2204 = vmatpush1.msra.mxu0 0.0
  %2205 = vmatprep.subr.mxu0 0.0
  %2206 = vmatpush1.msra.mxu0 0.0
  %2207 = vmatprep.subr.mxu0 0.0
  %2208 = vmatpush1.msra.mxu0 0.0
  %2209 = vmatprep.subr.mxu0 0.0
  %2210 = vmatpush1.msra.mxu0 0.0
  %2211 = vmatprep.subr.mxu0 0.0
  %2212 = vmatpush1.msra.mxu0 0.0
  %2213 = vmatprep.subr.mxu0 0.0
  %2214 = vmatpush1.msra.mxu0 0.0
  %2215 = vmatprep.subr.mxu0 0.0
  %2216 = vmatpush1.msra.mxu0 0.0
  %2217 = vmatprep.subr.mxu0 0.0
  %2218 = vmatpush1.msra.mxu0 0.0
  %2219 = vmatprep.subr.mxu0 0.0
  %2220 = vmatpush1.msra.mxu0 0.0
  %2221 = vmatprep.subr.mxu0 0.0
  %2222 = vmatpush1.msra.mxu0 0.0
  %2223 = vmatprep.subr.mxu0 0.0
  %2224 = vmatpush1.msra.mxu0 0.0
  %2225 = vmatprep.subr.mxu0 0.0
  %2226 = vmatpush1.msra.mxu0 0.0
  %2227 = vmatprep.mubr.f32.mxu0 0.0
  %2228 = vmatmul.mubr.f32.gmra.mrb[0].mxu0 %v2161
  %v2229 = vpop.f32.mrb[0].mxu0
  %v2230 = vadd.f32 %v1062, %v2229
  %v2231 = vpop.f32.mrb[0].mxu0
  %2232 = vdwg.mxu0
  %v2233 = vmax.f32 %v2230, 0.0
  %v2234 = vld [vmem:[%s9] sm:$0x1]
  %v2235 = vlaneseq
  %v2236 = vshrl.u32 %v2235, 7
  %v2237 = vsub.s32 0, %v2236
  %v2238 = vrot.slane %v2234, %v2237
  %vm2239 = vcmp.eq.s32.totalorder %v1142, %v2238
  %v2240 = vsel %vm2239, 1, 0
  %v2241 = vcvt.s32.f32 %v2240
  %v2243 = vsel %vm590, %v2241, 0
  %2245 = vmatprep.subr.mxu0 0.0
  %2246 = vmatpush1.msra.mxu0 %v2233
  %2247 = vmatprep.subr.mxu0 0.0
  %2248 = vmatpush1.msra.mxu0 0.0
  %2249 = vmatprep.subr.mxu0 0.0
  %2250 = vmatpush1.msra.mxu0 0.0
  %2251 = vmatprep.subr.mxu0 0.0
  %2252 = vmatpush1.msra.mxu0 0.0
  %2253 = vmatprep.subr.mxu0 0.0
  %2254 = vmatpush1.msra.mxu0 0.0
  %2255 = vmatprep.subr.mxu0 0.0
  %2256 = vmatpush1.msra.mxu0 0.0
  %2257 = vmatprep.subr.mxu0 0.0
  %2258 = vmatpush1.msra.mxu0 0.0
  %2259 = vmatprep.subr.mxu0 0.0
  %2260 = vmatpush1.msra.mxu0 0.0
  %2261 = vmatprep.subr.mxu0 0.0
  %2262 = vmatpush1.msra.mxu0 0.0
  %2263 = vmatprep.subr.mxu0 0.0
  %2264 = vmatpush1.msra.mxu0 0.0
  %2265 = vmatprep.subr.mxu0 0.0
  %2266 = vmatpush1.msra.mxu0 0.0
  %2267 = vmatprep.subr.mxu0 0.0
  %2268 = vmatpush1.msra.mxu0 0.0
  %2269 = vmatprep.subr.mxu0 0.0
  %2270 = vmatpush1.msra.mxu0 0.0
  %2271 = vmatprep.subr.mxu0 0.0
  %2272 = vmatpush1.msra.mxu0 0.0
  %2273 = vmatprep.subr.mxu0 0.0
  %2274 = vmatpush1.msra.mxu0 0.0
  %2275 = vmatprep.subr.mxu0 0.0
  %2276 = vmatpush1.msra.mxu0 0.0
  %2277 = vmatprep.subr.mxu0 0.0
  %2278 = vmatpush1.msra.mxu0 0.0
  %2279 = vmatprep.subr.mxu0 0.0
  %2280 = vmatpush1.msra.mxu0 0.0
  %2281 = vmatprep.subr.mxu0 0.0
  %2282 = vmatpush1.msra.mxu0 0.0
  %2283 = vmatprep.subr.mxu0 0.0
  %2284 = vmatpush1.msra.mxu0 0.0
  %2285 = vmatprep.subr.mxu0 0.0
  %2286 = vmatpush1.msra.mxu0 0.0
  %2287 = vmatprep.subr.mxu0 0.0
  %2288 = vmatpush1.msra.mxu0 0.0
  %2289 = vmatprep.subr.mxu0 0.0
  %2290 = vmatpush1.msra.mxu0 0.0
  %2291 = vmatprep.subr.mxu0 0.0
  %2292 = vmatpush1.msra.mxu0 0.0
  %2293 = vmatprep.subr.mxu0 0.0
  %2294 = vmatpush1.msra.mxu0 0.0
  %2295 = vmatprep.subr.mxu0 0.0
  %2296 = vmatpush1.msra.mxu0 0.0
  %2297 = vmatprep.subr.mxu0 0.0
  %2298 = vmatpush1.msra.mxu0 0.0
  %2299 = vmatprep.subr.mxu0 0.0
  %2300 = vmatpush1.msra.mxu0 0.0
  %2301 = vmatprep.subr.mxu0 0.0
  %2302 = vmatpush1.msra.mxu0 0.0
  %2303 = vmatprep.subr.mxu0 0.0
  %2304 = vmatpush1.msra.mxu0 0.0
  %2305 = vmatprep.subr.mxu0 0.0
  %2306 = vmatpush1.msra.mxu0 0.0
  %2307 = vmatprep.subr.mxu0 0.0
  %2308 = vmatpush1.msra.mxu0 0.0
  %2309 = vmatprep.mubr.f32.mxu0 0.0
  %2310 = vmatmul.mubr.f32.gmra.mrb[0].mxu0 %v2243
  %v2311 = vpop.f32.mrb[0].mxu0
  %v2312 = vadd.f32 0.0, %v2311
  %v2313 = vpop.f32.mrb[0].mxu0
  %2314 = vdwg.mxu0
  %v2315 = vld [vmem:[%s20] sm:$0x1f]
  %v2316 = vld [vmem:[%s21] sm:$0x1f]
  %vm2317 = vcmask 39936
  %v2319 = vsel %vm2317, %v2312, 0
  %vm2321 = vcmask 1044480
  %v2323 = vsel %vm2321, %v2316, 0
  %2325 = vmatprep.subr.mxu0 0.0
  %2326 = vmatpush1.msra.mxu0 %v2323
  %2327 = vmatprep.subr.mxu0 0.0
  %2328 = vmatpush1.msra.mxu0 0.0
  %2329 = vmatprep.subr.mxu0 0.0
  %2330 = vmatpush1.msra.mxu0 0.0
  %2331 = vmatprep.subr.mxu0 0.0
  %2332 = vmatpush1.msra.mxu0 0.0
  %2333 = vmatprep.subr.mxu0 0.0
  %2334 = vmatpush1.msra.mxu0 0.0
  %2335 = vmatprep.subr.mxu0 0.0
  %2336 = vmatpush1.msra.mxu0 0.0
  %2337 = vmatprep.subr.mxu0 0.0
  %2338 = vmatpush1.msra.mxu0 0.0
  %2339 = vmatprep.subr.mxu0 0.0
  %2340 = vmatpush1.msra.mxu0 0.0
  %2341 = vmatprep.subr.mxu0 0.0
  %2342 = vmatpush1.msra.mxu0 0.0
  %2343 = vmatprep.subr.mxu0 0.0
  %2344 = vmatpush1.msra.mxu0 0.0
  %2345 = vmatprep.subr.mxu0 0.0
  %2346 = vmatpush1.msra.mxu0 0.0
  %2347 = vmatprep.subr.mxu0 0.0
  %2348 = vmatpush1.msra.mxu0 0.0
  %2349 = vmatprep.subr.mxu0 0.0
  %2350 = vmatpush1.msra.mxu0 0.0
  %2351 = vmatprep.subr.mxu0 0.0
  %2352 = vmatpush1.msra.mxu0 0.0
  %2353 = vmatprep.subr.mxu0 0.0
  %2354 = vmatpush1.msra.mxu0 0.0
  %2355 = vmatprep.subr.mxu0 0.0
  %2356 = vmatpush1.msra.mxu0 0.0
  %2357 = vmatprep.subr.mxu0 0.0
  %2358 = vmatpush1.msra.mxu0 0.0
  %2359 = vmatprep.subr.mxu0 0.0
  %2360 = vmatpush1.msra.mxu0 0.0
  %2361 = vmatprep.subr.mxu0 0.0
  %2362 = vmatpush1.msra.mxu0 0.0
  %2363 = vmatprep.subr.mxu0 0.0
  %2364 = vmatpush1.msra.mxu0 0.0
  %2365 = vmatprep.subr.mxu0 0.0
  %2366 = vmatpush1.msra.mxu0 0.0
  %2367 = vmatprep.subr.mxu0 0.0
  %2368 = vmatpush1.msra.mxu0 0.0
  %2369 = vmatprep.subr.mxu0 0.0
  %2370 = vmatpush1.msra.mxu0 0.0
  %2371 = vmatprep.subr.mxu0 0.0
  %2372 = vmatpush1.msra.mxu0 0.0
  %2373 = vmatprep.subr.mxu0 0.0
  %2374 = vmatpush1.msra.mxu0 0.0
  %2375 = vmatprep.subr.mxu0 0.0
  %2376 = vmatpush1.msra.mxu0 0.0
  %2377 = vmatprep.subr.mxu0 0.0
  %2378 = vmatpush1.msra.mxu0 0.0
  %2379 = vmatprep.subr.mxu0 0.0
  %2380 = vmatpush1.msra.mxu0 0.0
  %2381 = vmatprep.subr.mxu0 0.0
  %2382 = vmatpush1.msra.mxu0 0.0
  %2383 = vmatprep.subr.mxu0 0.0
  %2384 = vmatpush1.msra.mxu0 0.0
  %2385 = vmatprep.subr.mxu0 0.0
  %2386 = vmatpush1.msra.mxu0 0.0
  %2387 = vmatprep.subr.mxu0 0.0
  %2388 = vmatpush1.msra.mxu0 0.0
  %2389 = vmatprep.mubr.f32.mxu0 0.0
  %2390 = vmatmul.mubr.f32.gmra.mrb[0].mxu0 %v2319
  %v2391 = vpop.f32.mrb[0].mxu0
  %v2392 = vadd.f32 0.0, %v2391
  %v2393 = vpop.f32.mrb[0].mxu0
  %2394 = vdwg.mxu0
  %v2396 = vsel %vm2317, %v1221, 0
  %v2399 = vsel %vm2321, %v2315, 0
  %2401 = vmatprep.subr.mxu0 0.0
  %2402 = vmatpush1.msra.mxu0 %v2399
  %2403 = vmatprep.subr.mxu0 0.0
  %2404 = vmatpush1.msra.mxu0 0.0
  %2405 = vmatprep.subr.mxu0 0.0
  %2406 = vmatpush1.msra.mxu0 0.0
  %2407 = vmatprep.subr.mxu0 0.0
  %2408 = vmatpush1.msra.mxu0 0.0
  %2409 = vmatprep.subr.mxu0 0.0
  %2410 = vmatpush1.msra.mxu0 0.0
  %2411 = vmatprep.subr.mxu0 0.0
  %2412 = vmatpush1.msra.mxu0 0.0
  %2413 = vmatprep.subr.mxu0 0.0
  %2414 = vmatpush1.msra.mxu0 0.0
  %2415 = vmatprep.subr.mxu0 0.0
  %2416 = vmatpush1.msra.mxu0 0.0
  %2417 = vmatprep.subr.mxu0 0.0
  %2418 = vmatpush1.msra.mxu0 0.0
  %2419 = vmatprep.subr.mxu0 0.0
  %2420 = vmatpush1.msra.mxu0 0.0
  %2421 = vmatprep.subr.mxu0 0.0
  %2422 = vmatpush1.msra.mxu0 0.0
  %2423 = vmatprep.subr.mxu0 0.0
  %2424 = vmatpush1.msra.mxu0 0.0
  %2425 = vmatprep.subr.mxu0 0.0
  %2426 = vmatpush1.msra.mxu0 0.0
  %2427 = vmatprep.subr.mxu0 0.0
  %2428 = vmatpush1.msra.mxu0 0.0
  %2429 = vmatprep.subr.mxu0 0.0
  %2430 = vmatpush1.msra.mxu0 0.0
  %2431 = vmatprep.subr.mxu0 0.0
  %2432 = vmatpush1.msra.mxu0 0.0
  %2433 = vmatprep.subr.mxu0 0.0
  %2434 = vmatpush1.msra.mxu0 0.0
  %2435 = vmatprep.subr.mxu0 0.0
  %2436 = vmatpush1.msra.mxu0 0.0
  %2437 = vmatprep.subr.mxu0 0.0
  %2438 = vmatpush1.msra.mxu0 0.0
  %2439 = vmatprep.subr.mxu0 0.0
  %2440 = vmatpush1.msra.mxu0 0.0
  %2441 = vmatprep.subr.mxu0 0.0
  %2442 = vmatpush1.msra.mxu0 0.0
  %2443 = vmatprep.subr.mxu0 0.0
  %2444 = vmatpush1.msra.mxu0 0.0
  %2445 = vmatprep.subr.mxu0 0.0
  %2446 = vmatpush1.msra.mxu0 0.0
  %2447 = vmatprep.subr.mxu0 0.0
  %2448 = vmatpush1.msra.mxu0 0.0
  %2449 = vmatprep.subr.mxu0 0.0
  %2450 = vmatpush1.msra.mxu0 0.0
  %2451 = vmatprep.subr.mxu0 0.0
  %2452 = vmatpush1.msra.mxu0 0.0
  %2453 = vmatprep.subr.mxu0 0.0
  %2454 = vmatpush1.msra.mxu0 0.0
  %2455 = vmatprep.subr.mxu0 0.0
  %2456 = vmatpush1.msra.mxu0 0.0
  %2457 = vmatprep.subr.mxu0 0.0
  %2458 = vmatpush1.msra.mxu0 0.0
  %2459 = vmatprep.subr.mxu0 0.0
  %2460 = vmatpush1.msra.mxu0 0.0
  %2461 = vmatprep.subr.mxu0 0.0
  %2462 = vmatpush1.msra.mxu0 0.0
  %2463 = vmatprep.subr.mxu0 0.0
  %2464 = vmatpush1.msra.mxu0 0.0
  %2465 = vmatprep.mubr.f32.mxu0 0.0
  %2466 = vmatmul.mubr.f32.gmra.mrb[0].mxu0 %v2396
  %v2467 = vpop.f32.mrb[0].mxu0
  %v2468 = vadd.f32 %v2392, %v2467
  %v2469 = vpop.f32.mrb[0].mxu0
  %2470 = vdwg.mxu0
  %v2471 = vld [vmem:[#allocation2] sm:$0x1]
  %v2473 = vlaneseq
  %v2474 = vshrl.u32 %v2473, 7
  %v2475 = vsub.s32 0, %v2474
  %v2476 = vrot.slane %v2471, %v2475
  %v2478 = vadd.f32 %v2468, %v2476
  %v2479 = vmax.f32 %v2478, 0.0
  %vm2480 = vcmask 1024
  %2481 = vst.msk [vmem:[%s23] sm:$0x3] %vm2480, %v2479
  // Predicated region
  $region94: #{polyhedron_model_forward.1} parent=0 // pred_check
    _
  $region95: #{polyhedron_model_forward.1} parent=0 // pred_check_branch
    %2483 = sbr.rel (0) target = $region97
  $region96: #{polyhedron_model_forward.1} parent=0 // pred_region
    _
  $region97: #{polyhedron_model_forward.1} parent=0 // pred_fallthru
    _
  // Predicated region
  $region98: #{polyhedron_model_forward.1} parent=0 // pred_check
    _
  $region99: #{polyhedron_model_forward.1} parent=0 // pred_check_branch
    %2485 = sbr.rel (0) target = $region101
  $region100: #{polyhedron_model_forward.1} parent=0 // pred_region
    _
  $region101: #{polyhedron_model_forward.1} parent=0 // pred_fallthru
    _

</llo_original>
